<compile_context>
chip_gen: v7x
topology: tpu7x:2x2x1
jax: 0.10.0
libtpu: 0.0.40
codegen_flags: <defaults>
</compile_context>

<pallas_src>
import math

import jax
import jax.numpy as jnp
from jax import lax
from jax.experimental import pallas as pl
from jax.experimental.pallas import tpu as pltpu


# ----------------------------------------------------------------------------
# Kernel: grid = (batch_tiles, e_layers).  One ResBlock per grid step; the
# embedding / LoRA init runs at layer 0, projection + de-norm at the last layer.
# ----------------------------------------------------------------------------
def tsmixer_kernel(x_ref, adapt_ref, emb_w_ref, emb_b_ref,
                   tw1_ref, tb1_ref, tw2_ref, tb2_ref,
                   cw1_ref, cb1_ref, cw2_ref, cb2_ref,
                   proj_w_ref, proj_b_ref,
                   out_ref, w_scr, mean_scr, std_scr):
    f32 = jnp.float32
    layer = pl.program_id(1)
    n_var, node, _ = adapt_ref.shape          # [N, node, E]
    rows = x_ref.shape[0]                     # R = TB * N
    dm = w_scr.shape[1]
    tb = rows // n_var
    cdt = tw1_ref.dtype                       # matmul compute dtype (bf16 / f32)

    # ---- layer 0: instance norm + inverted embedding + LoRA adaptation ------
    @pl.when(layer == 0)
    def _init():
        x = x_ref[...].astype(f32)                              # [R, S]
        mean = jnp.mean(x, axis=-1, keepdims=True)              # [R, 1]
        xc = x - mean
        var = jnp.mean(xc * xc, axis=-1, keepdims=True)         # unbiased=False
        stdev = jnp.sqrt(var + 1e-5)
        mean_scr[...] = mean
        std_scr[...] = stdev
        xn = xc / stdev                                         # [R, S]

        # DataEmbedding_inverted: Linear(seq_len -> E) per (batch, variate) row.
        xe = jnp.dot(xn.astype(cdt), emb_w_ref[...],
                     preferred_element_type=f32) + emb_b_ref[...]       # [R, E]

        # LoRA adaptation: adapt[b,n,d] = sum_e xe[b,n,e] * A[n,e,d]
        # (adapt_ref holds relu(adapter @ lora_w) stored as [N, node, E]).
        xe3 = xe.reshape(tb, n_var, xe.shape[-1])                        # [TB,N,E]
        ad = jnp.sum(xe3[:, :, None, :] * adapt_ref[...][None, :, :, :],
                     axis=-1)                                            # [TB,N,node]

        # concat [embedding | adaptation] along d_model, carried in VMEM scratch
        w_scr[...] = jnp.concatenate([xe, ad.reshape(rows, node)], axis=-1)

    # ---- ResBlock for this layer (only layer `layer` weights are resident) --
    w = w_scr[...]                                                       # [R,dm] f32

    # temporal MLP: mixes d_model (lane axis), M = TB*N rows on the MXU
    h = jnp.maximum(
        jnp.dot(w.astype(cdt), tw1_ref[0], preferred_element_type=f32)
        + tb1_ref[0], 0.0)
    w = w + jnp.dot(h.astype(cdt), tw2_ref[0],
                    preferred_element_type=f32) + tb2_ref[0]

    # channel MLP: mixes the enc_in variates per batch element
    wt = jnp.transpose(w.reshape(tb, n_var, dm), (0, 2, 1))              # [TB,dm,N]
    wt = wt.reshape(tb * dm, n_var)                                      # [TB*dm,N]
    h2 = jnp.maximum(
        jnp.dot(wt.astype(cdt), cw1_ref[0], preferred_element_type=f32)
        + cb1_ref[0], 0.0)                                               # [TB*dm,dm]
    ch = jnp.dot(h2.astype(cdt), cw2_ref[0],
                 preferred_element_type=f32) + cb2_ref[0]                # [TB*dm,N]
    ch = jnp.transpose(ch.reshape(tb, dm, n_var), (0, 2, 1))             # [TB,N,dm]
    w = w + ch.reshape(rows, dm)
    w_scr[...] = w

    # ---- last layer: projection + de-normalization, lane-dense store --------
    @pl.when(layer == pl.num_programs(1) - 1)
    def _finalize():
        dec = jnp.dot(w.astype(cdt), proj_w_ref[...],
                      preferred_element_type=f32) + proj_b_ref[...]      # [R, P]
        out_ref[...] = (dec * std_scr[...] + mean_scr[...]).astype(out_ref.dtype)


# ----------------------------------------------------------------------------
# Wrapper
# ----------------------------------------------------------------------------
def _ceil_to(v, m):
    return (v + m - 1) // m * m


def _block_bytes(shape, dtype):
    s = list(shape)
    s[-1] = _ceil_to(s[-1], 128)
    s[-2] = _ceil_to(s[-2], 16)
    n = 1
    for d in s:
        n *= int(d)
    return n * jnp.dtype(dtype).itemsize


def tsmixer_forward(x_enc, params, *, compute_dtype=jnp.bfloat16, max_batch_tile=8):
    B, S, N = x_enc.shape
    L, _, dm = params["tw1"].shape
    E = params["emb_w"].shape[1]
    node = params["lora_w"].shape[1]
    P = params["proj_w"].shape[1]
    cdt = jnp.dtype(compute_dtype)

    # Input-independent LoRA adapter, precomputed once: relu(adapter @ lora_w)
    # stored as [N, node, E] for a lane(E)-reduce inside the kernel.
    A = jax.nn.relu(jnp.einsum("ner,rd->ned", params["adapter"], params["lora_w"],
                               precision=lax.Precision.HIGHEST))
    At = jnp.transpose(A, (0, 2, 1)).astype(jnp.float32)                 # [N,node,E]

    # Matmul weights in compute dtype (bf16 on v6e/v7x); biases/adapter stay f32.
    emb_w = params["emb_w"].astype(cdt)
    tw1 = params["tw1"].astype(cdt)
    tw2 = params["tw2"].astype(cdt)
    cw1 = params["cw1"].astype(cdt)
    cw2 = params["cw2"].astype(cdt)
    proj_w = params["proj_w"].astype(cdt)

    # Lane-dense input: one row per (batch, variate) series, seq_len on lanes.
    x_rows = jnp.transpose(x_enc, (0, 2, 1)).reshape(B * N, S)

    tb = math.gcd(B, max_batch_tile)          # batch elements per grid step
    R = tb * N                                # rows per step (MXU M dimension)
    nb = B // tb
    grid = (nb, L)

    in_specs = [
        pl.BlockSpec((R, S), lambda b, l: (b, 0)),             # x rows
        pl.BlockSpec((N, node, E), lambda b, l: (0, 0, 0)),    # LoRA adapter A
        pl.BlockSpec((S, E), lambda b, l: (0, 0)),             # emb_w
        pl.BlockSpec((1, E), lambda b, l: (0, 0)),             # emb_b
        pl.BlockSpec((1, dm, dm), lambda b, l: (l, 0, 0)),     # tw1[l]
        pl.BlockSpec((1, 1, dm), lambda b, l: (l, 0, 0)),      # tb1[l]
        pl.BlockSpec((1, dm, dm), lambda b, l: (l, 0, 0)),     # tw2[l]
        pl.BlockSpec((1, 1, dm), lambda b, l: (l, 0, 0)),      # tb2[l]
        pl.BlockSpec((1, N, dm), lambda b, l: (l, 0, 0)),      # cw1[l]
        pl.BlockSpec((1, 1, dm), lambda b, l: (l, 0, 0)),      # cb1[l]
        pl.BlockSpec((1, dm, N), lambda b, l: (l, 0, 0)),      # cw2[l]
        pl.BlockSpec((1, 1, N), lambda b, l: (l, 0, 0)),       # cb2[l]
        pl.BlockSpec((dm, P), lambda b, l: (0, 0)),            # proj_w
        pl.BlockSpec((1, P), lambda b, l: (0, 0)),             # proj_b
    ]
    out_spec = pl.BlockSpec((R, P), lambda b, l: (b, 0))

    scratch_shapes = [
        pltpu.VMEM((R, dm), jnp.float32),    # activation carried across layers
        pltpu.VMEM((R, 1), jnp.float32),     # per-series mean
        pltpu.VMEM((R, 1), jnp.float32),     # per-series stdev
    ]

    # Explicit VMEM budget (blocks are double-buffered by the pipeline).
    block_dtypes = [
        ((R, S), x_rows.dtype), ((N, node, E), jnp.float32),
        ((S, E), cdt), ((1, E), jnp.float32),
        ((1, dm, dm), cdt), ((1, 1, dm), jnp.float32),
        ((1, dm, dm), cdt), ((1, 1, dm), jnp.float32),
        ((1, N, dm), cdt), ((1, 1, dm), jnp.float32),
        ((1, dm, N), cdt), ((1, 1, N), jnp.float32),
        ((dm, P), cdt), ((1, P), jnp.float32),
        ((R, P), x_enc.dtype),
    ]
    vmem_bytes = sum(2 * _block_bytes(s, d) for s, d in block_dtypes)
    vmem_bytes += _block_bytes((R, dm), jnp.float32)
    vmem_bytes += 2 * _block_bytes((R, 1), jnp.float32)
    vmem_limit = int(min(max(int(1.5 * vmem_bytes) + (4 << 20), 32 << 20), 100 << 20))

    # Advisory cost estimate for the XLA scheduler.
    flops = B * (2 * N * S * E + 2 * N * E * node + 8 * L * N * dm * dm
                 + 2 * N * dm * P)
    param_bytes = sum(int(a.size) * a.dtype.itemsize for a in (
        At, emb_w, params["emb_b"], tw1, params["tb1"], tw2, params["tb2"],
        cw1, params["cb1"], cw2, params["cb2"], proj_w, params["proj_b"]))
    bytes_accessed = (int(x_rows.size) * x_rows.dtype.itemsize
                      + B * N * P * 4 + nb * param_bytes)
    cost = pl.CostEstimate(flops=int(flops), transcendentals=int(2 * B * N),
                           bytes_accessed=int(bytes_accessed))

    grid_spec = pltpu.PrefetchScalarGridSpec(
        num_scalar_prefetch=0, grid=grid, in_specs=in_specs,
        out_specs=out_spec, scratch_shapes=scratch_shapes)

    out_rows = pl.pallas_call(
        tsmixer_kernel,
        out_shape=jax.ShapeDtypeStruct((B * N, P), x_enc.dtype),
        grid_spec=grid_spec,
        compiler_params=pltpu.CompilerParams(
            dimension_semantics=("parallel", "arbitrary"),
            vmem_limit_bytes=vmem_limit),
        cost_estimate=cost,
    )(x_rows, At, emb_w, params["emb_b"], tw1, params["tb1"], tw2, params["tb2"],
      cw1, params["cb1"], cw2, params["cb2"], proj_w, params["proj_b"])

    # [B*N, P] -> [B, pred_len, N]  (PyTorch output layout)
    return jnp.transpose(out_rows.reshape(B, N, P), (0, 2, 1))


# ----------------------------------------------------------------------------
# Deterministic parameter init.  Weights are stored pre-oriented (in, out) so
# every in-kernel matmul contracts (last dim of LHS, first dim of RHS);
# biases stored 2-D in broadcast-ready layout.
# ----------------------------------------------------------------------------
def init_params(key, *, seq_len, enc_in, d_model, node_dim, rank, pred_len, e_layers):
    E = d_model - node_dim
    ks = jax.random.split(key, 14)

    def w(k, fan_in, shape):
        return jax.random.normal(k, shape, jnp.float32) / jnp.sqrt(float(fan_in))

    return {
        "emb_w": w(ks[0], seq_len, (seq_len, E)),            # Linear(seq_len, E)
        "emb_b": w(ks[1], seq_len, (1, E)),
        "adapter": w(ks[2], E, (enc_in, E, rank)),           # nn.Parameter
        "lora_w": w(ks[3], rank, (rank, node_dim)),          # Linear(rank, node, bias=False)
        "tw1": w(ks[4], d_model, (e_layers, d_model, d_model)),
        "tb1": w(ks[5], d_model, (e_layers, 1, d_model)),
        "tw2": w(ks[6], d_model, (e_layers, d_model, d_model)),
        "tb2": w(ks[7], d_model, (e_layers, 1, d_model)),
        "cw1": w(ks[8], enc_in, (e_layers, enc_in, d_model)),
        "cb1": w(ks[9], enc_in, (e_layers, 1, d_model)),
        "cw2": w(ks[10], d_model, (e_layers, d_model, enc_in)),
        "cb2": w(ks[11], d_model, (e_layers, 1, enc_in)),
        "proj_w": w(ks[12], d_model, (d_model, pred_len)),   # Linear(d_model, pred_len)
        "proj_b": w(ks[13], d_model, (1, pred_len)),
    }


# ----------------------------------------------------------------------------
# Pure-JAX reference mirroring the PyTorch forward.  matmul_dtype lets us build
# a rounding-matched reference for the bf16-MXU kernel as well as a pure-f32 one.
# ----------------------------------------------------------------------------
def reference_forward(x_enc, params, matmul_dtype=jnp.float32):
    hi = lax.Precision.HIGHEST
    md = matmul_dtype

    def mm(a, b):
        return jnp.matmul(a.astype(md), b.astype(md), precision=hi,
                          preferred_element_type=jnp.float32)

    mean = jnp.mean(x_enc, axis=1, keepdims=True)
    xc = x_enc - mean
    stdev = jnp.sqrt(jnp.mean(xc * xc, axis=1, keepdims=True) + 1e-5)
    xn = xc / stdev                                                       # [B,S,N]

    xe = mm(jnp.transpose(xn, (0, 2, 1)), params["emb_w"]) + params["emb_b"]  # [B,N,E]
    A = jax.nn.relu(jnp.einsum("ner,rd->ned", params["adapter"], params["lora_w"],
                               precision=hi))                             # [N,E,node]
    At = jnp.transpose(A, (0, 2, 1))                                      # [N,node,E]
    adapt = jnp.sum(xe[:, :, None, :] * At[None], axis=-1)                # [B,N,node]
    w = jnp.concatenate([xe, adapt], axis=-1)                             # [B,N,dm]

    for i in range(params["tw1"].shape[0]):
        h = jax.nn.relu(mm(w, params["tw1"][i]) + params["tb1"][i])
        w = w + mm(h, params["tw2"][i]) + params["tb2"][i]
        wt = jnp.transpose(w, (0, 2, 1))                                  # [B,dm,N]
        h2 = jax.nn.relu(mm(wt, params["cw1"][i]) + params["cb1"][i])
        ch = mm(h2, params["cw2"][i]) + params["cb2"][i]                  # [B,dm,N]
        w = w + jnp.transpose(ch, (0, 2, 1))

    dec = mm(w, params["proj_w"]) + params["proj_b"]                      # [B,N,P]
    dec = jnp.transpose(dec, (0, 2, 1))                                   # [B,P,N]
    return dec * stdev + mean


if __name__ == "__main__":
    # Small config consistent with the module.
    B, seq_len, enc_in = 2, 16, 8
    d_model, node_dim, rank, pred_len, e_layers = 32, 8, 4, 8, 2

    key = jax.random.PRNGKey(0)
    kx, kp = jax.random.split(key)
    x_enc = jax.random.normal(kx, (B, seq_len, enc_in), jnp.float32)
    # x_mark_enc / x_dec / x_mark_dec are unused by Model.forecast.

    params = init_params(kp, seq_len=seq_len, enc_in=enc_in, d_model=d_model,
                         node_dim=node_dim, rank=rank, pred_len=pred_len,
                         e_layers=e_layers)

    out = tsmixer_forward(x_enc, params)          # bf16 MXU operands, f32 accumulation
    out = jax.block_until_ready(out)
    assert out.shape == (B, pred_len, enc_in)

    ref_same = reference_forward(x_enc, params, matmul_dtype=jnp.bfloat16)
    ref_f32 = reference_forward(x_enc, params, matmul_dtype=jnp.float32)
    err_same = float(jnp.max(jnp.abs(out - ref_same)))
    err_f32 = float(jnp.max(jnp.abs(out - ref_f32)))
    if err_same > 1e-2:
        raise AssertionError(
            f"kernel mismatch vs bf16-matched reference, max abs err = {err_same}")
    if err_f32 > 1e-1:
        raise AssertionError(
            f"kernel mismatch vs f32 reference, max abs err = {err_f32}")

    print("KERNEL_OK")
</pallas_src>

<mosaic_0001>
module attributes {stable_mosaic.version = 11 : i64} {
  func.func @tsmixer_kernel(%arg0: i32, %arg1: i32, %arg2: memref<16x16xf32, #tpu.memory_space<vmem>>, %arg3: memref<8x8x24xf32, #tpu.memory_space<vmem>>, %arg4: memref<16x24xbf16, #tpu.memory_space<vmem>>, %arg5: memref<1x24xf32, #tpu.memory_space<vmem>>, %arg6: memref<1x32x32xbf16, #tpu.memory_space<vmem>>, %arg7: memref<1x1x32xf32, #tpu.memory_space<vmem>>, %arg8: memref<1x32x32xbf16, #tpu.memory_space<vmem>>, %arg9: memref<1x1x32xf32, #tpu.memory_space<vmem>>, %arg10: memref<1x8x32xbf16, #tpu.memory_space<vmem>>, %arg11: memref<1x1x32xf32, #tpu.memory_space<vmem>>, %arg12: memref<1x32x8xbf16, #tpu.memory_space<vmem>>, %arg13: memref<1x1x8xf32, #tpu.memory_space<vmem>>, %arg14: memref<32x8xbf16, #tpu.memory_space<vmem>>, %arg15: memref<1x8xf32, #tpu.memory_space<vmem>>, %arg16: memref<16x8xf32, #tpu.memory_space<vmem>>, %arg17: memref<16x32xf32, #tpu.memory_space<vmem>>, %arg18: memref<16x1xf32, #tpu.memory_space<vmem>>, %arg19: memref<16x1xf32, #tpu.memory_space<vmem>>) attributes {dimension_semantics = [#tpu.dimension_semantics<parallel>, #tpu.dimension_semantics<arbitrary>], iteration_bounds = array<i64: 1, 2>, scalar_prefetch = 0 : i64, scratch_operands = 3 : i64, tpu.core_type = #tpu.core_type<tc>, window_params = [{transform_indices = @transform_0, window_bounds = array<i64: 16, 16>}, {pipeline_mode = #tpu.pipeline_mode<synchronous>, transform_indices = @transform_1, window_bounds = array<i64: 8, 8, 24>}, {pipeline_mode = #tpu.pipeline_mode<synchronous>, transform_indices = @transform_2, window_bounds = array<i64: 16, 24>}, {pipeline_mode = #tpu.pipeline_mode<synchronous>, transform_indices = @transform_3, window_bounds = array<i64: 1, 24>}, {transform_indices = @transform_4, window_bounds = array<i64: 1, 32, 32>}, {transform_indices = @transform_5, window_bounds = array<i64: 1, 1, 32>}, {transform_indices = @transform_6, window_bounds = array<i64: 1, 32, 32>}, {transform_indices = @transform_7, window_bounds = array<i64: 1, 1, 32>}, {transform_indices = @transform_8, window_bounds = array<i64: 1, 8, 32>}, {transform_indices = @transform_9, window_bounds = array<i64: 1, 1, 32>}, {transform_indices = @transform_10, window_bounds = array<i64: 1, 32, 8>}, {transform_indices = @transform_11, window_bounds = array<i64: 1, 1, 8>}, {pipeline_mode = #tpu.pipeline_mode<synchronous>, transform_indices = @transform_12, window_bounds = array<i64: 32, 8>}, {pipeline_mode = #tpu.pipeline_mode<synchronous>, transform_indices = @transform_13, window_bounds = array<i64: 1, 8>}, {transform_indices = @transform_14, window_bounds = array<i64: 16, 8>}]} {
    %c0_i32 = arith.constant 0 : i32
    %0 = arith.cmpi eq, %arg1, %c0_i32 : i32
    %1 = arith.extui %0 : i1 to i32
    %c0_i32_0 = arith.constant 0 : i32
    %2 = arith.cmpi ne, %1, %c0_i32_0 : i32
    scf.if %2 {
      %c0_34 = arith.constant 0 : index
      %c0_35 = arith.constant 0 : index
      %52 = vector.load %arg2[%c0_34, %c0_35] : memref<16x16xf32, #tpu.memory_space<vmem>>, vector<16x16xf32>
      %cst_36 = arith.constant dense<0.000000e+00> : vector<16xf32>
      %53 = vector.multi_reduction <add>, %52, %cst_36 [1] : vector<16x16xf32> to vector<16xf32>
      %54 = vector.shape_cast %53 : vector<16xf32> to vector<16x1xf32>
      %cst_37 = arith.constant 1.600000e+01 : f32
      %55 = vector.broadcast %cst_37 : f32 to vector<16x1xf32>
      %56 = arith.divf %54, %55 : vector<16x1xf32>
      %57 = vector.broadcast %56 : vector<16x1xf32> to vector<16x16xf32>
      %58 = arith.subf %52, %57 : vector<16x16xf32>
      %59 = arith.mulf %58, %58 : vector<16x16xf32>
      %cst_38 = arith.constant dense<0.000000e+00> : vector<16xf32>
      %60 = vector.multi_reduction <add>, %59, %cst_38 [1] : vector<16x16xf32> to vector<16xf32>
      %61 = vector.shape_cast %60 : vector<16xf32> to vector<16x1xf32>
      %cst_39 = arith.constant 1.600000e+01 : f32
      %62 = vector.broadcast %cst_39 : f32 to vector<16x1xf32>
      %63 = arith.divf %61, %62 : vector<16x1xf32>
      %cst_40 = arith.constant 9.99999974E-6 : f32
      %64 = vector.broadcast %cst_40 : f32 to vector<16x1xf32>
      %65 = arith.addf %63, %64 : vector<16x1xf32>
      %66 = math.sqrt %65 : vector<16x1xf32>
      %c0_41 = arith.constant 0 : index
      %c0_42 = arith.constant 0 : index
      %67 = vector.load %arg18[%c0_41, %c0_42] : memref<16x1xf32, #tpu.memory_space<vmem>>, vector<16x1xf32>
      tpu.vector_store %arg18[%c0_41, %c0_42], %56 {strides = array<i32>} : memref<16x1xf32, #tpu.memory_space<vmem>>, vector<16x1xf32>,
      %c0_43 = arith.constant 0 : index
      %c0_44 = arith.constant 0 : index
      %68 = vector.load %arg19[%c0_43, %c0_44] : memref<16x1xf32, #tpu.memory_space<vmem>>, vector<16x1xf32>
      tpu.vector_store %arg19[%c0_43, %c0_44], %66 {strides = array<i32>} : memref<16x1xf32, #tpu.memory_space<vmem>>, vector<16x1xf32>,
      %69 = vector.broadcast %66 : vector<16x1xf32> to vector<16x16xf32>
      %70 = arith.divf %58, %69 : vector<16x16xf32>
      %71 = arith.truncf %70 : vector<16x16xf32> to vector<16x16xbf16>
      %c0_45 = arith.constant 0 : index
      %c0_46 = arith.constant 0 : index
      %72 = vector.load %arg4[%c0_45, %c0_46] : memref<16x24xbf16, #tpu.memory_space<vmem>>, vector<16x24xbf16>
      %cst_47 = arith.constant dense<0.000000e+00> : vector<16x24xf32>
      %73 = tpu.matmul %71, %72, %cst_47 {dimension_numbers = #tpu.dot_dimension_numbers<[1], [0], [0], [1], [0, 0, 1, 1], [], []>} : vector<16x16xbf16>, vector<16x24xbf16>, vector<16x24xf32> -> vector<16x24xf32>
      %c0_48 = arith.constant 0 : index
      %c0_49 = arith.constant 0 : index
      %74 = vector.load %arg5[%c0_48, %c0_49] : memref<1x24xf32, #tpu.memory_space<vmem>>, vector<1x24xf32>
      %75 = vector.broadcast %74 : vector<1x24xf32> to vector<16x24xf32>
      %76 = arith.addf %73, %75 : vector<16x24xf32>
      %77 = vector.shape_cast %76 : vector<16x24xf32> to vector<2x8x24xf32>
      %78 = vector.shape_cast %77 : vector<2x8x24xf32> to vector<2x8x1x24xf32>
      %c0_50 = arith.constant 0 : index
      %c0_51 = arith.constant 0 : index
      %c0_52 = arith.constant 0 : index
      %79 = vector.load %arg3[%c0_50, %c0_51, %c0_52] : memref<8x8x24xf32, #tpu.memory_space<vmem>>, vector<8x8x24xf32>
      %80 = vector.shape_cast %79 : vector<8x8x24xf32> to vector<1x8x8x24xf32>
      %81 = vector.broadcast %78 : vector<2x8x1x24xf32> to vector<2x8x8x24xf32>
      %82 = vector.broadcast %80 : vector<1x8x8x24xf32> to vector<2x8x8x24xf32>
      %83 = arith.mulf %81, %82 : vector<2x8x8x24xf32>
      %cst_53 = arith.constant dense<0.000000e+00> : vector<2x8x8xf32>
      %84 = vector.multi_reduction <add>, %83, %cst_53 [3] : vector<2x8x8x24xf32> to vector<2x8x8xf32>
      %85 = vector.shape_cast %84 : vector<2x8x8xf32> to vector<16x8xf32>
      %86 = tpu.concatenate %76, %85 in 1 : vector<16x24xf32>, vector<16x8xf32> -> vector<16x32xf32>
      %c0_54 = arith.constant 0 : index
      %c0_55 = arith.constant 0 : index
      %87 = vector.load %arg17[%c0_54, %c0_55] : memref<16x32xf32, #tpu.memory_space<vmem>>, vector<16x32xf32>
      tpu.vector_store %arg17[%c0_54, %c0_55], %86 {strides = array<i32>} : memref<16x32xf32, #tpu.memory_space<vmem>>, vector<16x32xf32>,
    } else {
    }
    %c0 = arith.constant 0 : index
    %c0_1 = arith.constant 0 : index
    %3 = vector.load %arg17[%c0, %c0_1] : memref<16x32xf32, #tpu.memory_space<vmem>>, vector<16x32xf32>
    %4 = arith.truncf %3 : vector<16x32xf32> to vector<16x32xbf16>
    %c0_2 = arith.constant 0 : index
    %c0_3 = arith.constant 0 : index
    %c0_4 = arith.constant 0 : index
    %5 = vector.load %arg6[%c0_2, %c0_3, %c0_4] : memref<1x32x32xbf16, #tpu.memory_space<vmem>>, vector<1x32x32xbf16>
    %6 = vector.shape_cast %5 : vector<1x32x32xbf16> to vector<32x32xbf16>
    %cst = arith.constant dense<0.000000e+00> : vector<16x32xf32>
    %7 = tpu.matmul %4, %6, %cst {dimension_numbers = #tpu.dot_dimension_numbers<[1], [0], [0], [1], [0, 0, 1, 1], [], []>} : vector<16x32xbf16>, vector<32x32xbf16>, vector<16x32xf32> -> vector<16x32xf32>
    %c0_5 = arith.constant 0 : index
    %c0_6 = arith.constant 0 : index
    %c0_7 = arith.constant 0 : index
    %8 = vector.load %arg7[%c0_5, %c0_6, %c0_7] : memref<1x1x32xf32, #tpu.memory_space<vmem>>, vector<1x1x32xf32>
    %9 = vector.shape_cast %8 : vector<1x1x32xf32> to vector<1x32xf32>
    %10 = vector.broadcast %9 : vector<1x32xf32> to vector<16x32xf32>
    %11 = arith.addf %7, %10 : vector<16x32xf32>
    %cst_8 = arith.constant 0.000000e+00 : f32
    %12 = vector.broadcast %cst_8 : f32 to vector<16x32xf32>
    %13 = arith.maximumf %11, %12 : vector<16x32xf32>
    %14 = arith.truncf %13 : vector<16x32xf32> to vector<16x32xbf16>
    %c0_9 = arith.constant 0 : index
    %c0_10 = arith.constant 0 : index
    %c0_11 = arith.constant 0 : index
    %15 = vector.load %arg8[%c0_9, %c0_10, %c0_11] : memref<1x32x32xbf16, #tpu.memory_space<vmem>>, vector<1x32x32xbf16>
    %16 = vector.shape_cast %15 : vector<1x32x32xbf16> to vector<32x32xbf16>
    %cst_12 = arith.constant dense<0.000000e+00> : vector<16x32xf32>
    %17 = tpu.matmul %14, %16, %cst_12 {dimension_numbers = #tpu.dot_dimension_numbers<[1], [0], [0], [1], [0, 0, 1, 1], [], []>} : vector<16x32xbf16>, vector<32x32xbf16>, vector<16x32xf32> -> vector<16x32xf32>
    %18 = arith.addf %3, %17 : vector<16x32xf32>
    %c0_13 = arith.constant 0 : index
    %c0_14 = arith.constant 0 : index
    %c0_15 = arith.constant 0 : index
    %19 = vector.load %arg9[%c0_13, %c0_14, %c0_15] : memref<1x1x32xf32, #tpu.memory_space<vmem>>, vector<1x1x32xf32>
    %20 = vector.shape_cast %19 : vector<1x1x32xf32> to vector<1x32xf32>
    %21 = vector.broadcast %20 : vector<1x32xf32> to vector<16x32xf32>
    %22 = arith.addf %18, %21 : vector<16x32xf32>
    %23 = vector.shape_cast %22 : vector<16x32xf32> to vector<2x8x32xf32>
    %24 = tpu.transpose %23, [0, 2, 1] : vector<2x8x32xf32> -> vector<2x32x8xf32>
    %25 = vector.shape_cast %24 : vector<2x32x8xf32> to vector<64x8xf32>
    %26 = arith.truncf %25 : vector<64x8xf32> to vector<64x8xbf16>
    %c0_16 = arith.constant 0 : index
    %c0_17 = arith.constant 0 : index
    %c0_18 = arith.constant 0 : index
    %27 = vector.load %arg10[%c0_16, %c0_17, %c0_18] : memref<1x8x32xbf16, #tpu.memory_space<vmem>>, vector<1x8x32xbf16>
    %28 = vector.shape_cast %27 : vector<1x8x32xbf16> to vector<8x32xbf16>
    %cst_19 = arith.constant dense<0.000000e+00> : vector<64x32xf32>
    %29 = tpu.matmul %26, %28, %cst_19 {dimension_numbers = #tpu.dot_dimension_numbers<[1], [0], [0], [1], [0, 0, 1, 1], [], []>} : vector<64x8xbf16>, vector<8x32xbf16>, vector<64x32xf32> -> vector<64x32xf32>
    %c0_20 = arith.constant 0 : index
    %c0_21 = arith.constant 0 : index
    %c0_22 = arith.constant 0 : index
    %30 = vector.load %arg11[%c0_20, %c0_21, %c0_22] : memref<1x1x32xf32, #tpu.memory_space<vmem>>, vector<1x1x32xf32>
    %31 = vector.shape_cast %30 : vector<1x1x32xf32> to vector<1x32xf32>
    %32 = vector.broadcast %31 : vector<1x32xf32> to vector<64x32xf32>
    %33 = arith.addf %29, %32 : vector<64x32xf32>
    %cst_23 = arith.constant 0.000000e+00 : f32
    %34 = vector.broadcast %cst_23 : f32 to vector<64x32xf32>
    %35 = arith.maximumf %33, %34 : vector<64x32xf32>
    %36 = arith.truncf %35 : vector<64x32xf32> to vector<64x32xbf16>
    %c0_24 = arith.constant 0 : index
    %c0_25 = arith.constant 0 : index
    %c0_26 = arith.constant 0 : index
    %37 = vector.load %arg12[%c0_24, %c0_25, %c0_26] : memref<1x32x8xbf16, #tpu.memory_space<vmem>>, vector<1x32x8xbf16>
    %38 = vector.shape_cast %37 : vector<1x32x8xbf16> to vector<32x8xbf16>
    %cst_27 = arith.constant dense<0.000000e+00> : vector<64x8xf32>
    %39 = tpu.matmul %36, %38, %cst_27 {dimension_numbers = #tpu.dot_dimension_numbers<[1], [0], [0], [1], [0, 0, 1, 1], [], []>} : vector<64x32xbf16>, vector<32x8xbf16>, vector<64x8xf32> -> vector<64x8xf32>
    %c0_28 = arith.constant 0 : index
    %c0_29 = arith.constant 0 : index
    %c0_30 = arith.constant 0 : index
    %40 = vector.load %arg13[%c0_28, %c0_29, %c0_30] : memref<1x1x8xf32, #tpu.memory_space<vmem>>, vector<1x1x8xf32>
    %41 = vector.shape_cast %40 : vector<1x1x8xf32> to vector<1x8xf32>
    %42 = vector.broadcast %41 : vector<1x8xf32> to vector<64x8xf32>
    %43 = arith.addf %39, %42 : vector<64x8xf32>
    %44 = vector.shape_cast %43 : vector<64x8xf32> to vector<2x32x8xf32>
    %45 = tpu.transpose %44, [0, 2, 1] : vector<2x32x8xf32> -> vector<2x8x32xf32>
    %46 = vector.shape_cast %45 : vector<2x8x32xf32> to vector<16x32xf32>
    %47 = arith.addf %22, %46 : vector<16x32xf32>
    %c0_31 = arith.constant 0 : index
    %c0_32 = arith.constant 0 : index
    %48 = vector.load %arg17[%c0_31, %c0_32] : memref<16x32xf32, #tpu.memory_space<vmem>>, vector<16x32xf32>
    tpu.vector_store %arg17[%c0_31, %c0_32], %47 {strides = array<i32>} : memref<16x32xf32, #tpu.memory_space<vmem>>, vector<16x32xf32>,
    %c1_i32 = arith.constant 1 : i32
    %49 = arith.cmpi eq, %arg1, %c1_i32 : i32
    %50 = arith.extui %49 : i1 to i32
    %c0_i32_33 = arith.constant 0 : i32
    %51 = arith.cmpi ne, %50, %c0_i32_33 : i32
    scf.if %51 {
      %52 = arith.truncf %47 : vector<16x32xf32> to vector<16x32xbf16>
      %c0_34 = arith.constant 0 : index
      %c0_35 = arith.constant 0 : index
      %53 = vector.load %arg14[%c0_34, %c0_35] : memref<32x8xbf16, #tpu.memory_space<vmem>>, vector<32x8xbf16>
      %cst_36 = arith.constant dense<0.000000e+00> : vector<16x8xf32>
      %54 = tpu.matmul %52, %53, %cst_36 {dimension_numbers = #tpu.dot_dimension_numbers<[1], [0], [0], [1], [0, 0, 1, 1], [], []>} : vector<16x32xbf16>, vector<32x8xbf16>, vector<16x8xf32> -> vector<16x8xf32>
      %c0_37 = arith.constant 0 : index
      %c0_38 = arith.constant 0 : index
      %55 = vector.load %arg15[%c0_37, %c0_38] : memref<1x8xf32, #tpu.memory_space<vmem>>, vector<1x8xf32>
      %56 = vector.broadcast %55 : vector<1x8xf32> to vector<16x8xf32>
      %57 = arith.addf %54, %56 : vector<16x8xf32>
      %c0_39 = arith.constant 0 : index
      %c0_40 = arith.constant 0 : index
      %58 = vector.load %arg19[%c0_39, %c0_40] : memref<16x1xf32, #tpu.memory_space<vmem>>, vector<16x1xf32>
      %59 = vector.broadcast %58 : vector<16x1xf32> to vector<16x8xf32>
      %60 = arith.mulf %57, %59 : vector<16x8xf32>
      %c0_41 = arith.constant 0 : index
      %c0_42 = arith.constant 0 : index
      %61 = vector.load %arg18[%c0_41, %c0_42] : memref<16x1xf32, #tpu.memory_space<vmem>>, vector<16x1xf32>
      %62 = vector.broadcast %61 : vector<16x1xf32> to vector<16x8xf32>
      %63 = arith.addf %60, %62 : vector<16x8xf32>
      %c0_43 = arith.constant 0 : index
      %c0_44 = arith.constant 0 : index
      %64 = vector.load %arg16[%c0_43, %c0_44] : memref<16x8xf32, #tpu.memory_space<vmem>>, vector<16x8xf32>
      tpu.vector_store %arg16[%c0_43, %c0_44], %63 {strides = array<i32>} : memref<16x8xf32, #tpu.memory_space<vmem>>, vector<16x8xf32>,
    } else {
    }
    return
  }
  func.func @transform_0(%arg0: i32, %arg1: i32) -> (i32, i32) {
    %c0_i32 = arith.constant 0 : i32
    %c0_i32_0 = arith.constant 0 : i32
    return %arg0, %c0_i32 : i32, i32
  }
  func.func @transform_1(%arg0: i32, %arg1: i32) -> (i32, i32, i32) {
    %c0_i32 = arith.constant 0 : i32
    %c0_i32_0 = arith.constant 0 : i32
    %c0_i32_1 = arith.constant 0 : i32
    %c0_i32_2 = arith.constant 0 : i32
    return %c0_i32, %c0_i32_0, %c0_i32_1 : i32, i32, i32
  }
  func.func @transform_2(%arg0: i32, %arg1: i32) -> (i32, i32) {
    %c0_i32 = arith.constant 0 : i32
    %c0_i32_0 = arith.constant 0 : i32
    %c0_i32_1 = arith.constant 0 : i32
    return %c0_i32, %c0_i32_0 : i32, i32
  }
  func.func @transform_3(%arg0: i32, %arg1: i32) -> (i32, i32) {
    %c0_i32 = arith.constant 0 : i32
    %c0_i32_0 = arith.constant 0 : i32
    %c0_i32_1 = arith.constant 0 : i32
    return %c0_i32, %c0_i32_0 : i32, i32
  }
  func.func @transform_4(%arg0: i32, %arg1: i32) -> (i32, i32, i32) {
    %c0_i32 = arith.constant 0 : i32
    %c0_i32_0 = arith.constant 0 : i32
    %c0_i32_1 = arith.constant 0 : i32
    return %arg1, %c0_i32, %c0_i32_0 : i32, i32, i32
  }
  func.func @transform_5(%arg0: i32, %arg1: i32) -> (i32, i32, i32) {
    %c0_i32 = arith.constant 0 : i32
    %c0_i32_0 = arith.constant 0 : i32
    %c0_i32_1 = arith.constant 0 : i32
    return %arg1, %c0_i32, %c0_i32_0 : i32, i32, i32
  }
  func.func @transform_6(%arg0: i32, %arg1: i32) -> (i32, i32, i32) {
    %c0_i32 = arith.constant 0 : i32
    %c0_i32_0 = arith.constant 0 : i32
    %c0_i32_1 = arith.constant 0 : i32
    return %arg1, %c0_i32, %c0_i32_0 : i32, i32, i32
  }
  func.func @transform_7(%arg0: i32, %arg1: i32) -> (i32, i32, i32) {
    %c0_i32 = arith.constant 0 : i32
    %c0_i32_0 = arith.constant 0 : i32
    %c0_i32_1 = arith.constant 0 : i32
    return %arg1, %c0_i32, %c0_i32_0 : i32, i32, i32
  }
  func.func @transform_8(%arg0: i32, %arg1: i32) -> (i32, i32, i32) {
    %c0_i32 = arith.constant 0 : i32
    %c0_i32_0 = arith.constant 0 : i32
    %c0_i32_1 = arith.constant 0 : i32
    return %arg1, %c0_i32, %c0_i32_0 : i32, i32, i32
  }
  func.func @transform_9(%arg0: i32, %arg1: i32) -> (i32, i32, i32) {
    %c0_i32 = arith.constant 0 : i32
    %c0_i32_0 = arith.constant 0 : i32
    %c0_i32_1 = arith.constant 0 : i32
    return %arg1, %c0_i32, %c0_i32_0 : i32, i32, i32
  }
  func.func @transform_10(%arg0: i32, %arg1: i32) -> (i32, i32, i32) {
    %c0_i32 = arith.constant 0 : i32
    %c0_i32_0 = arith.constant 0 : i32
    %c0_i32_1 = arith.constant 0 : i32
    return %arg1, %c0_i32, %c0_i32_0 : i32, i32, i32
  }
  func.func @transform_11(%arg0: i32, %arg1: i32) -> (i32, i32, i32) {
    %c0_i32 = arith.constant 0 : i32
    %c0_i32_0 = arith.constant 0 : i32
    %c0_i32_1 = arith.constant 0 : i32
    return %arg1, %c0_i32, %c0_i32_0 : i32, i32, i32
  }
  func.func @transform_12(%arg0: i32, %arg1: i32) -> (i32, i32) {
    %c0_i32 = arith.constant 0 : i32
    %c0_i32_0 = arith.constant 0 : i32
    %c0_i32_1 = arith.constant 0 : i32
    return %c0_i32, %c0_i32_0 : i32, i32
  }
  func.func @transform_13(%arg0: i32, %arg1: i32) -> (i32, i32) {
    %c0_i32 = arith.constant 0 : i32
    %c0_i32_0 = arith.constant 0 : i32
    %c0_i32_1 = arith.constant 0 : i32
    return %c0_i32, %c0_i32_0 : i32, i32
  }
  func.func @transform_14(%arg0: i32, %arg1: i32) -> (i32, i32) {
    %c0_i32 = arith.constant 0 : i32
    %c0_i32_0 = arith.constant 0 : i32
    return %arg0, %c0_i32 : i32, i32
  }
}

</mosaic_0001>

<llo_original>
// kernel: tpu_custom_call.1
$region0: #{tpu_custom_call.1}
  #allocation0 [shape = 'u32[]', space=smem, size = 0x4, offset = 0x4, fixed_abs, tag = 'smem constant byte address 0x4 - core index']
  #allocation1 [shape = 'u32[144,128]{1,0:T(1,128)}', space=vmem, size = 0x12000, scoped, tag = 'internal scratch']
  #allocation2 [shape = 'f32[16,32]{1,0:T(8,128)}', space=vmem, size = 0x2000, scoped, tag = 'scratch operand']
  #allocation3 [shape = 'f32[16,1]{1,0:T(8,128)}', space=vmem, size = 0x2000, scoped, tag = 'scratch operand']
  #allocation4 [shape = 'f32[16,1]{1,0:T(8,128)}', space=vmem, size = 0x2000, scoped, tag = 'scratch operand']
  %s0 = inlined_call_operand.hbm [shape: f32[16,16], index: 0, kind: input, shape index: {}]
  %s1 = inlined_call_operand.hbm [shape: f32[8,8,24], index: 1, kind: input, shape index: {}]
  %s2 = inlined_call_operand.hbm [shape: bf16[16,24], index: 2, kind: input, shape index: {}]
  %s3 = inlined_call_operand.hbm [shape: f32[1,24], index: 3, kind: input, shape index: {}]
  %s4 = inlined_call_operand.vmem [shape: bf16[2,32,32], index: 4, kind: input, shape index: {}]
  %s5 = inlined_call_operand.vmem [shape: f32[2,1,32], index: 5, kind: input, shape index: {}]
  %s6 = inlined_call_operand.vmem [shape: bf16[2,32,32], index: 6, kind: input, shape index: {}]
  %s7 = inlined_call_operand.hbm [shape: f32[2,1,32], index: 7, kind: input, shape index: {}]
  %s8 = inlined_call_operand.vmem [shape: bf16[2,8,32], index: 8, kind: input, shape index: {}]
  %s9 = inlined_call_operand.vmem [shape: f32[2,1,32], index: 9, kind: input, shape index: {}]
  %s10 = inlined_call_operand.vmem [shape: bf16[2,32,8], index: 10, kind: input, shape index: {}]
  %s11 = inlined_call_operand.vmem [shape: f32[2,1,8], index: 11, kind: input, shape index: {}]
  %s12 = inlined_call_operand.vmem [shape: bf16[32,8], index: 12, kind: input, shape index: {}]
  %s13 = inlined_call_operand.vmem [shape: f32[1,8], index: 13, kind: input, shape index: {}]
  %s14 = inlined_call_operand.vmem [shape: f32[16,8], index: 14, kind: output, shape index: {}]
  %s15 = sld [smem:[#allocation0]]
  $region117: #{tpu_custom_call.1} parent=0
    _
  %s17 = ssub.s32 1, %s15
  %s18 = scalar_select 0, %s17, %s15
  $region1: #{tpu_custom_call.1} parent=0
    #allocation5 [shape = 'u8[8192]{0}', space=vmem, size = 0x2000, scoped, tag = 'input window, operand 0, single buffered']
    #allocation6 [shape = 's32[2]{0}', space=sflag, size = 0x8, scoped, tag = 'scoped memory for tpu_custom_call.1']
    #allocation7 [shape = 'u8[32768]{0}', space=vmem, size = 0x8000, scoped, tag = 'input window, operand 1, single buffered']
    #allocation8 [shape = 's32[1]{0}', space=sflag, size = 0x4, scoped, tag = 'scoped memory for tpu_custom_call.1']
    #allocation9 [shape = 'u8[4096]{0}', space=vmem, size = 0x1000, scoped, tag = 'input window, operand 2, single buffered']
    #allocation10 [shape = 'u8[512]{0}', space=vmem, size = 0x400, scoped, tag = 'input window, operand 3, single buffered']
    #allocation11 [shape = 's32[1]{0}', space=sflag, size = 0x4, scoped, tag = 'scoped memory for tpu_custom_call.1']
    #allocation12 [shape = 'u8[1024]{0}', space=vmem, size = 0x400, scoped, tag = 'input window, operand 7']
    %19 = vsyncpa [#allocation6], 0
    %20 = vsyncpa [#allocation8], 0
    %21 = vsyncpa [#allocation11], 0
    loop: start=0, step=1, limit=4
    $region2: #{tpu_custom_call.1} parent=1 // loop_pre_header
      _
    $region3: #{tpu_custom_call.1} parent=1 // loop_header
      %s23 = sphi 0, %s27
      %p24 = scmp.ge.s32.totalorder %s23, 4
      %s30 = sphi 0, %s42
      %s31 = sphi 0, %s38
      %s32 = sphi 0, %s30
      %s33 = sphi 0, %s31
      %s34 = sphi 0, %s32
      %s35 = sphi 0, %s33
      %s45 = sphi 0, %s47
      %s48 = sphi 0, %s45
      %s49 = sphi 0, %s48
      %s65 = sphi 0, %s49
      %s69 = sphi 0, %s69
      %s71 = sphi 0, %s69
      %s72 = sphi 0, %s71
      %s86 = sphi 0, %s72
      %s90 = sphi 0, %s90
      %s92 = sphi 0, %s90
      %s93 = sphi 0, %s92
      %s107 = sphi 0, %s93
      %s111 = sphi 0, %s111
      %s113 = sphi 0, %s111
      %s114 = sphi 0, %s113
      %s128 = sphi 0, %s114
      %s134 = sphi 0, %s136
      %s137 = sphi 0, %s134
      %s138 = sphi 0, %s137
      %s154 = sphi 0, %s138
      %s160 = sphi 0, %s162
      %s163 = sphi 0, %s160
      %s164 = sphi 0, %s163
      %s180 = sphi 0, %s164
      %s186 = sphi 0, %s188
      %s189 = sphi 0, %s186
      %s190 = sphi 0, %s189
      %s206 = sphi 0, %s190
      %s212 = sphi 0, %s214
      %s215 = sphi 0, %s212
      %s216 = sphi 0, %s215
      %s232 = sphi 0, %s216
      %s238 = sphi 0, %s240
      %s241 = sphi 0, %s238
      %s242 = sphi 0, %s241
      %s258 = sphi 0, %s242
      %s264 = sphi 0, %s266
      %s267 = sphi 0, %s264
      %s268 = sphi 0, %s267
      %s284 = sphi 0, %s268
      %s290 = sphi 0, %s292
      %s293 = sphi 0, %s290
      %s294 = sphi 0, %s293
      %s310 = sphi 0, %s294
      %s316 = sphi 0, %s318
      %s319 = sphi 0, %s316
      %s320 = sphi 0, %s319
      %s336 = sphi 0, %s320
      %s340 = sphi 0, %s340
      %s342 = sphi 0, %s340
      %s343 = sphi 0, %s342
      %s357 = sphi 0, %s343
      %s361 = sphi 0, %s361
      %s363 = sphi 0, %s361
      %s364 = sphi 0, %s363
      %s378 = sphi 0, %s364
      %s384 = sphi 0, %s386
      %s387 = sphi 0, %s384
      %s388 = sphi 0, %s387
      %s404 = sphi 0, %s388
    $region4: #{tpu_custom_call.1} parent=1 // loop_header_branch
      %26 = sbr.rel (%p24) target = $region8
    $region5: #{tpu_custom_call.1} parent=1 // loop_body
      %s28 = ssub.s32 %s23, 1
      %s29 = ssub.s32 %s23, 2
      %s36 = sadd.s32 1, %s31
      %p37 = scmp.ge.s32.totalorder %s36, 2
      %s38 = scalar_select %p37, 0, %s36
      %s39 = sadd.s32 1, %s30
      %s40 = scalar_select %p37, %s39, %s30
      %p41 = scmp.ge.s32.totalorder %s40, 1
      %s42 = scalar_select %p41, 0, %s40
      %s43 = ssub.s32 %s30, %s42
      %p44 = scmp.eq.s32.totalorder %s43, 0
      %s46 = sadd.s32 %s45, 1
      %s47 = scalar_select %p44, %s45, %s46
      %p50 = pneg %p44
      %p51 = scmp.eq.s32.totalorder %s23, 1
      %p52 = por %p50, %p51
      %p53 = scmp.ne.s32.totalorder %s45, %s48
      %p54 = scmp.eq.s32.totalorder %s23, 0
      %p55 = por %p53, %p54
      %p56 = scmp.ne.s32.totalorder %s45, %s48
      %p57 = scmp.eq.s32.totalorder %s28, 1
      %p58 = por %p56, %p57
      %p59 = scmp.ne.s32.totalorder %s48, %s49
      %p60 = scmp.eq.s32.totalorder %s28, 0
      %p61 = por %p59, %p60
      %p62 = scmp.ne.s32.totalorder %s48, %s49
      %p63 = scmp.eq.s32.totalorder %s29, 1
      %p64 = por %p62, %p63
      %p66 = scmp.ne.s32.totalorder %s49, %s65
      %p67 = scmp.eq.s32.totalorder %s29, 0
      %p68 = por %p66, %p67
      %s70 = sadd.s32 %s69, 1
      %p73 = scmp.eq.s32.totalorder %s23, 1
      %p74 = scmp.ne.s32.totalorder %s69, %s71
      %p75 = scmp.eq.s32.totalorder %s23, 0
      %p76 = por %p74, %p75
      %p77 = scmp.ne.s32.totalorder %s69, %s71
      %p78 = scmp.eq.s32.totalorder %s28, 1
      %p79 = por %p77, %p78
      %p80 = scmp.ne.s32.totalorder %s71, %s72
      %p81 = scmp.eq.s32.totalorder %s28, 0
      %p82 = por %p80, %p81
      %p83 = scmp.ne.s32.totalorder %s71, %s72
      %p84 = scmp.eq.s32.totalorder %s29, 1
      %p85 = por %p83, %p84
      %p87 = scmp.ne.s32.totalorder %s72, %s86
      %p88 = scmp.eq.s32.totalorder %s29, 0
      %p89 = por %p87, %p88
      %s91 = sadd.s32 %s90, 1
      %p94 = scmp.eq.s32.totalorder %s23, 1
      %p95 = scmp.ne.s32.totalorder %s90, %s92
      %p96 = scmp.eq.s32.totalorder %s23, 0
      %p97 = por %p95, %p96
      %p98 = scmp.ne.s32.totalorder %s90, %s92
      %p99 = scmp.eq.s32.totalorder %s28, 1
      %p100 = por %p98, %p99
      %p101 = scmp.ne.s32.totalorder %s92, %s93
      %p102 = scmp.eq.s32.totalorder %s28, 0
      %p103 = por %p101, %p102
      %p104 = scmp.ne.s32.totalorder %s92, %s93
      %p105 = scmp.eq.s32.totalorder %s29, 1
      %p106 = por %p104, %p105
      %p108 = scmp.ne.s32.totalorder %s93, %s107
      %p109 = scmp.eq.s32.totalorder %s29, 0
      %p110 = por %p108, %p109
      %s112 = sadd.s32 %s111, 1
      %p115 = scmp.eq.s32.totalorder %s23, 1
      %p116 = scmp.ne.s32.totalorder %s111, %s113
      %p117 = scmp.eq.s32.totalorder %s23, 0
      %p118 = por %p116, %p117
      %p119 = scmp.ne.s32.totalorder %s111, %s113
      %p120 = scmp.eq.s32.totalorder %s28, 1
      %p121 = por %p119, %p120
      %p122 = scmp.ne.s32.totalorder %s113, %s114
      %p123 = scmp.eq.s32.totalorder %s28, 0
      %p124 = por %p122, %p123
      %p125 = scmp.ne.s32.totalorder %s113, %s114
      %p126 = scmp.eq.s32.totalorder %s29, 1
      %p127 = por %p125, %p126
      %p129 = scmp.ne.s32.totalorder %s114, %s128
      %p130 = scmp.eq.s32.totalorder %s29, 0
      %p131 = por %p129, %p130
      %s132 = ssub.s32 %s31, %s38
      %p133 = scmp.eq.s32.totalorder %s132, 0
      %s135 = sadd.s32 %s134, 1
      %s136 = scalar_select %p133, %s134, %s135
      %p139 = pneg %p133
      %p140 = scmp.eq.s32.totalorder %s23, 1
      %p141 = por %p139, %p140
      %p142 = scmp.ne.s32.totalorder %s134, %s137
      %p143 = scmp.eq.s32.totalorder %s23, 0
      %p144 = por %p142, %p143
      %p145 = scmp.ne.s32.totalorder %s134, %s137
      %p146 = scmp.eq.s32.totalorder %s28, 1
      %p147 = por %p145, %p146
      %p148 = scmp.ne.s32.totalorder %s137, %s138
      %p149 = scmp.eq.s32.totalorder %s28, 0
      %p150 = por %p148, %p149
      %p151 = scmp.ne.s32.totalorder %s137, %s138
      %p152 = scmp.eq.s32.totalorder %s29, 1
      %p153 = por %p151, %p152
      %p155 = scmp.ne.s32.totalorder %s138, %s154
      %p156 = scmp.eq.s32.totalorder %s29, 0
      %p157 = por %p155, %p156
      %s158 = ssub.s32 %s31, %s38
      %p159 = scmp.eq.s32.totalorder %s158, 0
      %s161 = sadd.s32 %s160, 1
      %s162 = scalar_select %p159, %s160, %s161
      %p165 = pneg %p159
      %p166 = scmp.eq.s32.totalorder %s23, 1
      %p167 = por %p165, %p166
      %p168 = scmp.ne.s32.totalorder %s160, %s163
      %p169 = scmp.eq.s32.totalorder %s23, 0
      %p170 = por %p168, %p169
      %p171 = scmp.ne.s32.totalorder %s160, %s163
      %p172 = scmp.eq.s32.totalorder %s28, 1
      %p173 = por %p171, %p172
      %p174 = scmp.ne.s32.totalorder %s163, %s164
      %p175 = scmp.eq.s32.totalorder %s28, 0
      %p176 = por %p174, %p175
      %p177 = scmp.ne.s32.totalorder %s163, %s164
      %p178 = scmp.eq.s32.totalorder %s29, 1
      %p179 = por %p177, %p178
      %p181 = scmp.ne.s32.totalorder %s164, %s180
      %p182 = scmp.eq.s32.totalorder %s29, 0
      %p183 = por %p181, %p182
      %s184 = ssub.s32 %s31, %s38
      %p185 = scmp.eq.s32.totalorder %s184, 0
      %s187 = sadd.s32 %s186, 1
      %s188 = scalar_select %p185, %s186, %s187
      %p191 = pneg %p185
      %p192 = scmp.eq.s32.totalorder %s23, 1
      %p193 = por %p191, %p192
      %p194 = scmp.ne.s32.totalorder %s186, %s189
      %p195 = scmp.eq.s32.totalorder %s23, 0
      %p196 = por %p194, %p195
      %p197 = scmp.ne.s32.totalorder %s186, %s189
      %p198 = scmp.eq.s32.totalorder %s28, 1
      %p199 = por %p197, %p198
      %p200 = scmp.ne.s32.totalorder %s189, %s190
      %p201 = scmp.eq.s32.totalorder %s28, 0
      %p202 = por %p200, %p201
      %p203 = scmp.ne.s32.totalorder %s189, %s190
      %p204 = scmp.eq.s32.totalorder %s29, 1
      %p205 = por %p203, %p204
      %p207 = scmp.ne.s32.totalorder %s190, %s206
      %p208 = scmp.eq.s32.totalorder %s29, 0
      %p209 = por %p207, %p208
      %s210 = ssub.s32 %s31, %s38
      %p211 = scmp.eq.s32.totalorder %s210, 0
      %s213 = sadd.s32 %s212, 1
      %s214 = scalar_select %p211, %s212, %s213
      %p217 = pneg %p211
      %p218 = scmp.eq.s32.totalorder %s23, 1
      %p219 = por %p217, %p218
      %p220 = scmp.ne.s32.totalorder %s212, %s215
      %p221 = scmp.eq.s32.totalorder %s23, 0
      %p222 = por %p220, %p221
      %p223 = scmp.ne.s32.totalorder %s212, %s215
      %p224 = scmp.eq.s32.totalorder %s28, 1
      %p225 = por %p223, %p224
      %p226 = scmp.ne.s32.totalorder %s215, %s216
      %p227 = scmp.eq.s32.totalorder %s28, 0
      %p228 = por %p226, %p227
      %p229 = scmp.ne.s32.totalorder %s215, %s216
      %p230 = scmp.eq.s32.totalorder %s29, 1
      %p231 = por %p229, %p230
      %p233 = scmp.ne.s32.totalorder %s216, %s232
      %p234 = scmp.eq.s32.totalorder %s29, 0
      %p235 = por %p233, %p234
      %s236 = ssub.s32 %s31, %s38
      %p237 = scmp.eq.s32.totalorder %s236, 0
      %s239 = sadd.s32 %s238, 1
      %s240 = scalar_select %p237, %s238, %s239
      %p243 = pneg %p237
      %p244 = scmp.eq.s32.totalorder %s23, 1
      %p245 = por %p243, %p244
      %p246 = scmp.ne.s32.totalorder %s238, %s241
      %p247 = scmp.eq.s32.totalorder %s23, 0
      %p248 = por %p246, %p247
      %p249 = scmp.ne.s32.totalorder %s238, %s241
      %p250 = scmp.eq.s32.totalorder %s28, 1
      %p251 = por %p249, %p250
      %p252 = scmp.ne.s32.totalorder %s241, %s242
      %p253 = scmp.eq.s32.totalorder %s28, 0
      %p254 = por %p252, %p253
      %p255 = scmp.ne.s32.totalorder %s241, %s242
      %p256 = scmp.eq.s32.totalorder %s29, 1
      %p257 = por %p255, %p256
      %p259 = scmp.ne.s32.totalorder %s242, %s258
      %p260 = scmp.eq.s32.totalorder %s29, 0
      %p261 = por %p259, %p260
      %s262 = ssub.s32 %s31, %s38
      %p263 = scmp.eq.s32.totalorder %s262, 0
      %s265 = sadd.s32 %s264, 1
      %s266 = scalar_select %p263, %s264, %s265
      %p269 = pneg %p263
      %p270 = scmp.eq.s32.totalorder %s23, 1
      %p271 = por %p269, %p270
      %p272 = scmp.ne.s32.totalorder %s264, %s267
      %p273 = scmp.eq.s32.totalorder %s23, 0
      %p274 = por %p272, %p273
      %p275 = scmp.ne.s32.totalorder %s264, %s267
      %p276 = scmp.eq.s32.totalorder %s28, 1
      %p277 = por %p275, %p276
      %p278 = scmp.ne.s32.totalorder %s267, %s268
      %p279 = scmp.eq.s32.totalorder %s28, 0
      %p280 = por %p278, %p279
      %p281 = scmp.ne.s32.totalorder %s267, %s268
      %p282 = scmp.eq.s32.totalorder %s29, 1
      %p283 = por %p281, %p282
      %p285 = scmp.ne.s32.totalorder %s268, %s284
      %p286 = scmp.eq.s32.totalorder %s29, 0
      %p287 = por %p285, %p286
      %s288 = ssub.s32 %s31, %s38
      %p289 = scmp.eq.s32.totalorder %s288, 0
      %s291 = sadd.s32 %s290, 1
      %s292 = scalar_select %p289, %s290, %s291
      %p295 = pneg %p289
      %p296 = scmp.eq.s32.totalorder %s23, 1
      %p297 = por %p295, %p296
      %p298 = scmp.ne.s32.totalorder %s290, %s293
      %p299 = scmp.eq.s32.totalorder %s23, 0
      %p300 = por %p298, %p299
      %p301 = scmp.ne.s32.totalorder %s290, %s293
      %p302 = scmp.eq.s32.totalorder %s28, 1
      %p303 = por %p301, %p302
      %p304 = scmp.ne.s32.totalorder %s293, %s294
      %p305 = scmp.eq.s32.totalorder %s28, 0
      %p306 = por %p304, %p305
      %p307 = scmp.ne.s32.totalorder %s293, %s294
      %p308 = scmp.eq.s32.totalorder %s29, 1
      %p309 = por %p307, %p308
      %p311 = scmp.ne.s32.totalorder %s294, %s310
      %p312 = scmp.eq.s32.totalorder %s29, 0
      %p313 = por %p311, %p312
      %s314 = ssub.s32 %s31, %s38
      %p315 = scmp.eq.s32.totalorder %s314, 0
      %s317 = sadd.s32 %s316, 1
      %s318 = scalar_select %p315, %s316, %s317
      %p321 = pneg %p315
      %p322 = scmp.eq.s32.totalorder %s23, 1
      %p323 = por %p321, %p322
      %p324 = scmp.ne.s32.totalorder %s316, %s319
      %p325 = scmp.eq.s32.totalorder %s23, 0
      %p326 = por %p324, %p325
      %p327 = scmp.ne.s32.totalorder %s316, %s319
      %p328 = scmp.eq.s32.totalorder %s28, 1
      %p329 = por %p327, %p328
      %p330 = scmp.ne.s32.totalorder %s319, %s320
      %p331 = scmp.eq.s32.totalorder %s28, 0
      %p332 = por %p330, %p331
      %p333 = scmp.ne.s32.totalorder %s319, %s320
      %p334 = scmp.eq.s32.totalorder %s29, 1
      %p335 = por %p333, %p334
      %p337 = scmp.ne.s32.totalorder %s320, %s336
      %p338 = scmp.eq.s32.totalorder %s29, 0
      %p339 = por %p337, %p338
      %s341 = sadd.s32 %s340, 1
      %p344 = scmp.eq.s32.totalorder %s23, 1
      %p345 = scmp.ne.s32.totalorder %s340, %s342
      %p346 = scmp.eq.s32.totalorder %s23, 0
      %p347 = por %p345, %p346
      %p348 = scmp.ne.s32.totalorder %s340, %s342
      %p349 = scmp.eq.s32.totalorder %s28, 1
      %p350 = por %p348, %p349
      %p351 = scmp.ne.s32.totalorder %s342, %s343
      %p352 = scmp.eq.s32.totalorder %s28, 0
      %p353 = por %p351, %p352
      %p354 = scmp.ne.s32.totalorder %s342, %s343
      %p355 = scmp.eq.s32.totalorder %s29, 1
      %p356 = por %p354, %p355
      %p358 = scmp.ne.s32.totalorder %s343, %s357
      %p359 = scmp.eq.s32.totalorder %s29, 0
      %p360 = por %p358, %p359
      %s362 = sadd.s32 %s361, 1
      %p365 = scmp.eq.s32.totalorder %s23, 1
      %p366 = scmp.ne.s32.totalorder %s361, %s363
      %p367 = scmp.eq.s32.totalorder %s23, 0
      %p368 = por %p366, %p367
      %p369 = scmp.ne.s32.totalorder %s361, %s363
      %p370 = scmp.eq.s32.totalorder %s28, 1
      %p371 = por %p369, %p370
      %p372 = scmp.ne.s32.totalorder %s363, %s364
      %p373 = scmp.eq.s32.totalorder %s28, 0
      %p374 = por %p372, %p373
      %p375 = scmp.ne.s32.totalorder %s363, %s364
      %p376 = scmp.eq.s32.totalorder %s29, 1
      %p377 = por %p375, %p376
      %p379 = scmp.ne.s32.totalorder %s364, %s378
      %p380 = scmp.eq.s32.totalorder %s29, 0
      %p381 = por %p379, %p380
      %s382 = ssub.s32 %s30, %s42
      %p383 = scmp.eq.s32.totalorder %s382, 0
      %s385 = sadd.s32 %s384, 1
      %s386 = scalar_select %p383, %s384, %s385
      %p389 = pneg %p383
      %p390 = scmp.eq.s32.totalorder %s23, 1
      %p391 = por %p389, %p390
      %p392 = scmp.ne.s32.totalorder %s384, %s387
      %p393 = scmp.eq.s32.totalorder %s23, 0
      %p394 = por %p392, %p393
      %p395 = scmp.ne.s32.totalorder %s384, %s387
      %p396 = scmp.eq.s32.totalorder %s28, 1
      %p397 = por %p395, %p396
      %p398 = scmp.ne.s32.totalorder %s387, %s388
      %p399 = scmp.eq.s32.totalorder %s28, 0
      %p400 = por %p398, %p399
      %p401 = scmp.ne.s32.totalorder %s387, %s388
      %p402 = scmp.eq.s32.totalorder %s29, 1
      %p403 = por %p401, %p402
      %p405 = scmp.ne.s32.totalorder %s388, %s404
      %p406 = scmp.eq.s32.totalorder %s29, 0
      %p407 = por %p405, %p406
      %p408 = scmp.le.s32.totalorder 1, %s23
      %p409 = scmp.lt.s32.totalorder %s23, 3
      %p410 = pnand %p408, %p409
      %p411 = pneg %p410
      // Predicated region
      $region9: #{tpu_custom_call.1} parent=5 // pred_check
        _
      $region10: #{tpu_custom_call.1} parent=5 // pred_check_branch
        %413 = sbr.rel (%p410) target = $region12
      $region11: #{tpu_custom_call.1} parent=5 // pred_region
        %s414 = ssub.s32 %s23, 1
        // Predicated region
        $region13: #{tpu_custom_call.1} parent=11 // pred_check
          %p415 = pneg %p61
        $region14: #{tpu_custom_call.1} parent=11 // pred_check_branch
          %417 = sbr.rel (%p415) target = $region16
        $region15: #{tpu_custom_call.1} parent=11 // pred_region
          %s418 = smul.u32 2, %s32
          %s420 = ssub.s32 256, 256
          %421 = vsyncadd [#allocation6], %s420
          %s422 = smul.addr %s418, 128
          %s423 = scalar_lea.hbm %s0, %s422
          %s424 = sshll.u32 [#allocation5], 4
          %s425 = int_to_ptr.vmem [resolvable:$true] %s424
          %430 = dma.hbm_to_vmem [thread:$0]  %s423, 256, %s425, [#allocation6], 128, 128, 8
        $region16: #{tpu_custom_call.1} parent=11 // pred_fallthru
          _
        // Predicated region
        $region17: #{tpu_custom_call.1} parent=11 // pred_check
          %p431 = pneg %p82
        $region18: #{tpu_custom_call.1} parent=11 // pred_check_branch
          %433 = sbr.rel (%p431) target = $region20
        $region19: #{tpu_custom_call.1} parent=11 // pred_region
          %s435 = ssub.s32 1024, 1024
          %436 = vsyncadd [#allocation8], %s435
          %s437 = sshll.u32 [#allocation7], 4
          %s438 = int_to_ptr.vmem [resolvable:$true] %s437
          %443 = dma.hbm_to_vmem [thread:$0]  %s1, 1024, %s438, [#allocation8], 128, 128, 8
        $region20: #{tpu_custom_call.1} parent=11 // pred_fallthru
          _
        // Predicated region
        $region21: #{tpu_custom_call.1} parent=11 // pred_check
          %p444 = pneg %p103
        $region22: #{tpu_custom_call.1} parent=11 // pred_check_branch
          %446 = sbr.rel (%p444) target = $region24
        $region23: #{tpu_custom_call.1} parent=11 // pred_region
          %s448 = ssub.s32 128, 128
          %449 = vsyncadd [#allocation8], %s448
          %s450 = sshll.u32 [#allocation9], 4
          %s451 = int_to_ptr.vmem [resolvable:$true] %s450
          %456 = dma.hbm_to_vmem [thread:$0]  %s2, 128, %s451, [#allocation8], 64, 64, 4
        $region24: #{tpu_custom_call.1} parent=11 // pred_fallthru
          _
        // Predicated region
        $region25: #{tpu_custom_call.1} parent=11 // pred_check
          %p457 = pneg %p124
        $region26: #{tpu_custom_call.1} parent=11 // pred_check_branch
          %459 = sbr.rel (%p457) target = $region28
        $region27: #{tpu_custom_call.1} parent=11 // pred_region
          %s461 = ssub.s32 16, 16
          %462 = vsyncadd [#allocation11], %s461
          %s464 = sshll.u32 [#allocation10], 4
          %s465 = int_to_ptr.vmem [resolvable:$true] %s464
          %467 = dma.hbm_to_vmem [thread:$0]  %s3, 16, %s465, [#allocation11]
        $region28: #{tpu_custom_call.1} parent=11 // pred_fallthru
          _
        // Predicated region
        $region29: #{tpu_custom_call.1} parent=11 // pred_check
          %p468 = pneg %p353
        $region30: #{tpu_custom_call.1} parent=11 // pred_check_branch
          %470 = sbr.rel (%p468) target = $region32
        $region31: #{tpu_custom_call.1} parent=11 // pred_region
          _
        $region32: #{tpu_custom_call.1} parent=11 // pred_fallthru
          _
        // Predicated region
        $region33: #{tpu_custom_call.1} parent=11 // pred_check
          %p471 = pneg %p374
        $region34: #{tpu_custom_call.1} parent=11 // pred_check_branch
          %473 = sbr.rel (%p471) target = $region36
        $region35: #{tpu_custom_call.1} parent=11 // pred_region
          _
        $region36: #{tpu_custom_call.1} parent=11 // pred_fallthru
          _
      $region12: #{tpu_custom_call.1} parent=5 // pred_fallthru
        _
      %p474 = scmp.lt.s32.totalorder %s23, 2
      // Predicated region
      $region37: #{tpu_custom_call.1} parent=5 // pred_check
        %p475 = pneg %p474
      $region38: #{tpu_custom_call.1} parent=5 // pred_check_branch
        %477 = sbr.rel (%p475) target = $region40
      $region39: #{tpu_custom_call.1} parent=5 // pred_region
        // Predicated region
        $region41: #{tpu_custom_call.1} parent=39 // pred_check
          %p478 = pneg %p144
        $region42: #{tpu_custom_call.1} parent=39 // pred_check_branch
          %480 = sbr.rel (%p478) target = $region44
        $region43: #{tpu_custom_call.1} parent=39 // pred_region
          %p481 = scmp.lt.s32.totalorder %s31, 1
          %s482 = scalar_select %p481, %s31, 1
          %s483 = smul.addr %s482, 4
          %s484 = smul.addr %s483, 4
          %s485 = scalar_lea.vmem %s4, %s484
        $region44: #{tpu_custom_call.1} parent=39 // pred_fallthru
          _
        // Predicated region
        $region45: #{tpu_custom_call.1} parent=39 // pred_check
          %p486 = pneg %p170
        $region46: #{tpu_custom_call.1} parent=39 // pred_check_branch
          %488 = sbr.rel (%p486) target = $region48
        $region47: #{tpu_custom_call.1} parent=39 // pred_region
          %p489 = scmp.lt.s32.totalorder %s31, 1
          %s490 = scalar_select %p489, %s31, 1
          %s491 = scalar_lea.vmem %s5, %s490
        $region48: #{tpu_custom_call.1} parent=39 // pred_fallthru
          _
        // Predicated region
        $region49: #{tpu_custom_call.1} parent=39 // pred_check
          %p492 = pneg %p196
        $region50: #{tpu_custom_call.1} parent=39 // pred_check_branch
          %494 = sbr.rel (%p492) target = $region52
        $region51: #{tpu_custom_call.1} parent=39 // pred_region
          %p495 = scmp.lt.s32.totalorder %s31, 1
          %s496 = scalar_select %p495, %s31, 1
          %s497 = smul.addr %s496, 4
          %s498 = smul.addr %s497, 4
          %s499 = scalar_lea.vmem %s6, %s498
        $region52: #{tpu_custom_call.1} parent=39 // pred_fallthru
          _
        // Predicated region
        $region53: #{tpu_custom_call.1} parent=39 // pred_check
          %p500 = pneg %p222
        $region54: #{tpu_custom_call.1} parent=39 // pred_check_branch
          %502 = sbr.rel (%p500) target = $region56
        $region55: #{tpu_custom_call.1} parent=39 // pred_region
          %s503 = sand.u32 %s23, 1
          %s504 = scalar_lea.sflag [#allocation6], %s503
          %s505 = sand.u32 %s212, 1
          %s506 = scalar_lea.vmem [#allocation12], %s505
          %s508 = ssub.s32 16, 16
          %509 = vsyncadd %s504, %s508
          %s510 = smul.addr %s31, 16
          %s511 = scalar_lea.hbm %s7, %s510
          %s513 = sshll.u32 %s506, 4
          %s514 = int_to_ptr.vmem [resolvable:$true] %s513
          %516 = dma.hbm_to_vmem [thread:$0]  %s511, 16, %s514, %s504
        $region56: #{tpu_custom_call.1} parent=39 // pred_fallthru
          _
        // Predicated region
        $region57: #{tpu_custom_call.1} parent=39 // pred_check
          %p517 = pneg %p248
        $region58: #{tpu_custom_call.1} parent=39 // pred_check_branch
          %519 = sbr.rel (%p517) target = $region60
        $region59: #{tpu_custom_call.1} parent=39 // pred_region
          %p520 = scmp.lt.s32.totalorder %s31, 1
          %s521 = scalar_select %p520, %s31, 1
          %s522 = smul.addr %s521, 4
          %s523 = scalar_lea.vmem %s8, %s522
        $region60: #{tpu_custom_call.1} parent=39 // pred_fallthru
          _
        // Predicated region
        $region61: #{tpu_custom_call.1} parent=39 // pred_check
          %p524 = pneg %p274
        $region62: #{tpu_custom_call.1} parent=39 // pred_check_branch
          %526 = sbr.rel (%p524) target = $region64
        $region63: #{tpu_custom_call.1} parent=39 // pred_region
          %p527 = scmp.lt.s32.totalorder %s31, 1
          %s528 = scalar_select %p527, %s31, 1
          %s529 = scalar_lea.vmem %s9, %s528
        $region64: #{tpu_custom_call.1} parent=39 // pred_fallthru
          _
        // Predicated region
        $region65: #{tpu_custom_call.1} parent=39 // pred_check
          %p530 = pneg %p300
        $region66: #{tpu_custom_call.1} parent=39 // pred_check_branch
          %532 = sbr.rel (%p530) target = $region68
        $region67: #{tpu_custom_call.1} parent=39 // pred_region
          %p533 = scmp.lt.s32.totalorder %s31, 1
          %s534 = scalar_select %p533, %s31, 1
          %s535 = smul.addr %s534, 4
          %s536 = smul.addr %s535, 4
          %s537 = scalar_lea.vmem %s10, %s536
        $region68: #{tpu_custom_call.1} parent=39 // pred_fallthru
          _
        // Predicated region
        $region69: #{tpu_custom_call.1} parent=39 // pred_check
          %p538 = pneg %p326
        $region70: #{tpu_custom_call.1} parent=39 // pred_check_branch
          %540 = sbr.rel (%p538) target = $region72
        $region71: #{tpu_custom_call.1} parent=39 // pred_region
          %p541 = scmp.lt.s32.totalorder %s31, 1
          %s542 = scalar_select %p541, %s31, 1
          %s543 = scalar_lea.vmem %s11, %s542
        $region72: #{tpu_custom_call.1} parent=39 // pred_fallthru
          _
      $region40: #{tpu_custom_call.1} parent=5 // pred_fallthru
        _
      %p544 = scmp.le.s32.totalorder 1, %s23
      %p545 = scmp.lt.s32.totalorder %s23, 3
      %p546 = pnand %p544, %p545
      %p547 = pneg %p546
      // Predicated region
      $region73: #{tpu_custom_call.1} parent=5 // pred_check
        _
      $region74: #{tpu_custom_call.1} parent=5 // pred_check_branch
        %549 = sbr.rel (%p546) target = $region76
      $region75: #{tpu_custom_call.1} parent=5 // pred_region
        %s550 = ssub.s32 %s23, 1
        // Predicated region
        $region77: #{tpu_custom_call.1} parent=75 // pred_check
          %p551 = pneg %p61
        $region78: #{tpu_custom_call.1} parent=75 // pred_check_branch
          %553 = sbr.rel (%p551) target = $region80
        $region79: #{tpu_custom_call.1} parent=75 // pred_region
          %554 = dma.done [#allocation6], 256
        $region80: #{tpu_custom_call.1} parent=75 // pred_fallthru
          _
        // Predicated region
        $region81: #{tpu_custom_call.1} parent=75 // pred_check
          %p555 = pneg %p82
        $region82: #{tpu_custom_call.1} parent=75 // pred_check_branch
          %557 = sbr.rel (%p555) target = $region84
        $region83: #{tpu_custom_call.1} parent=75 // pred_region
          %558 = dma.done [#allocation8], 1024
        $region84: #{tpu_custom_call.1} parent=75 // pred_fallthru
          _
        // Predicated region
        $region85: #{tpu_custom_call.1} parent=75 // pred_check
          %p559 = pneg %p103
        $region86: #{tpu_custom_call.1} parent=75 // pred_check_branch
          %561 = sbr.rel (%p559) target = $region88
        $region87: #{tpu_custom_call.1} parent=75 // pred_region
          %562 = dma.done [#allocation8], 128
        $region88: #{tpu_custom_call.1} parent=75 // pred_fallthru
          _
        // Predicated region
        $region89: #{tpu_custom_call.1} parent=75 // pred_check
          %p563 = pneg %p124
        $region90: #{tpu_custom_call.1} parent=75 // pred_check_branch
          %565 = sbr.rel (%p563) target = $region92
        $region91: #{tpu_custom_call.1} parent=75 // pred_region
          %566 = dma.done [#allocation11], 16
        $region92: #{tpu_custom_call.1} parent=75 // pred_fallthru
          _
        %s567 = sand.u32 %s28, 1
        %s568 = scalar_lea.sflag [#allocation6], %s567
        %s569 = sand.u32 %s215, 1
        %s570 = scalar_lea.vmem [#allocation12], %s569
        // Predicated region
        $region93: #{tpu_custom_call.1} parent=75 // pred_check
          %p571 = pneg %p228
        $region94: #{tpu_custom_call.1} parent=75 // pred_check_branch
          %573 = sbr.rel (%p571) target = $region96
        $region95: #{tpu_custom_call.1} parent=75 // pred_region
          %574 = dma.done %s568, 16
        $region96: #{tpu_custom_call.1} parent=75 // pred_fallthru
          _
        %p575 = pneg %p61
        %p576 = pneg %p58
        %p577 = pneg %p82
        %p578 = pneg %p79
        %p579 = pneg %p103
        %p580 = pneg %p100
        %p581 = pneg %p124
        %p582 = pneg %p121
        %p583 = scmp.lt.s32.totalorder %s33, 1
        %s584 = scalar_select %p583, %s33, 1
        %s585 = smul.addr %s584, 4
        %s586 = smul.addr %s585, 4
        %s587 = scalar_lea.vmem %s4, %s586
        %p588 = pneg %p150
        %p589 = pneg %p147
        %p590 = scmp.lt.s32.totalorder %s33, 1
        %s591 = scalar_select %p590, %s33, 1
        %s592 = scalar_lea.vmem %s5, %s591
        %p593 = pneg %p176
        %p594 = pneg %p173
        %p595 = scmp.lt.s32.totalorder %s33, 1
        %s596 = scalar_select %p595, %s33, 1
        %s597 = smul.addr %s596, 4
        %s598 = smul.addr %s597, 4
        %s599 = scalar_lea.vmem %s6, %s598
        %p600 = pneg %p202
        %p601 = pneg %p199
        %s602 = sand.u32 %s28, 1
        %s603 = scalar_lea.sflag [#allocation6], %s602
        %s604 = sand.u32 %s215, 1
        %s605 = scalar_lea.vmem [#allocation12], %s604
        %p606 = pneg %p228
        %p607 = pneg %p225
        %p608 = scmp.lt.s32.totalorder %s33, 1
        %s609 = scalar_select %p608, %s33, 1
        %s610 = smul.addr %s609, 4
        %s611 = scalar_lea.vmem %s8, %s610
        %p612 = pneg %p254
        %p613 = pneg %p251
        %p614 = scmp.lt.s32.totalorder %s33, 1
        %s615 = scalar_select %p614, %s33, 1
        %s616 = scalar_lea.vmem %s9, %s615
        %p617 = pneg %p280
        %p618 = pneg %p277
        %p619 = scmp.lt.s32.totalorder %s33, 1
        %s620 = scalar_select %p619, %s33, 1
        %s621 = smul.addr %s620, 4
        %s622 = smul.addr %s621, 4
        %s623 = scalar_lea.vmem %s10, %s622
        %p624 = pneg %p306
        %p625 = pneg %p303
        %p626 = scmp.lt.s32.totalorder %s33, 1
        %s627 = scalar_select %p626, %s33, 1
        %s628 = scalar_lea.vmem %s11, %s627
        %p629 = pneg %p332
        %p630 = pneg %p329
        %p631 = pneg %p353
        %p632 = pneg %p350
        %p633 = pneg %p374
        %p634 = pneg %p371
        %p635 = pneg %p400
        %p636 = pneg %p397
        %s637 = smul.u32 2, %s32
        %p638 = scmp.lt.s32.totalorder %s637, 1
        %s639 = scalar_select %p638, %s637, 1
        %s640 = smul.addr %s639, 8
        %s641 = scalar_lea.vmem %s14, %s640
        %s642 = smul.u32 2, %s32
        %p643 = scmp.lt.s32.totalorder %s33, 1
        %s644 = scalar_select %p643, %s33, 1
        %s645 = smul.addr %s644, 4
        %s646 = smul.addr %s645, 4
        %s647 = scalar_lea.vmem %s4, %s646
        %p648 = scmp.lt.s32.totalorder %s33, 1
        %s649 = scalar_select %p648, %s33, 1
        %s650 = scalar_lea.vmem %s5, %s649
        %p651 = scmp.lt.s32.totalorder %s33, 1
        %s652 = scalar_select %p651, %s33, 1
        %s653 = smul.addr %s652, 4
        %s654 = smul.addr %s653, 4
        %s655 = scalar_lea.vmem %s6, %s654
        %p656 = scmp.lt.s32.totalorder %s33, 1
        %s657 = scalar_select %p656, %s33, 1
        %s658 = smul.addr %s657, 4
        %s659 = scalar_lea.vmem %s8, %s658
        %p660 = scmp.lt.s32.totalorder %s33, 1
        %s661 = scalar_select %p660, %s33, 1
        %s662 = scalar_lea.vmem %s9, %s661
        %p663 = scmp.lt.s32.totalorder %s33, 1
        %s664 = scalar_select %p663, %s33, 1
        %s665 = smul.addr %s664, 4
        %s666 = smul.addr %s665, 4
        %s667 = scalar_lea.vmem %s10, %s666
        %p668 = scmp.lt.s32.totalorder %s33, 1
        %s669 = scalar_select %p668, %s33, 1
        %s670 = scalar_lea.vmem %s11, %s669
        %s671 = smul.u32 2, %s32
        %p672 = scmp.lt.s32.totalorder %s671, 1
        %s673 = scalar_select %p672, %s671, 1
        %s674 = smul.addr %s673, 8
        %s675 = scalar_lea.vmem %s14, %s674
        %s676 = smul.u32 2, %s32
        %p678 = scmp.eq.s32.totalorder %s33, 0
        // Predicated region
        $region97: #{tpu_custom_call.1} parent=75 // pred_check
          %p679 = pneg %p678
        $region98: #{tpu_custom_call.1} parent=75 // pred_check_branch
          %681 = sbr.rel (%p679) target = $region100
        $region99: #{tpu_custom_call.1} parent=75 // pred_region
          %v682 = vld [vmem:[#allocation5] sm:$0xff]
          %v683 = vld [vmem:[#allocation5 + $0x8] sm:$0xff]
          %vm684 = vcmask 130048
          %v685 = vsel %vm684, %v682, 0.0
          %686 = vadd.xlane.f32.xlu0 %v685
          %v687 = vpop.xlane.xlu0 %686
          %v688 = vsel %vm684, %v683, 0.0
          %689 = vadd.xlane.f32.xlu0 %v688
          %v690 = vpop.xlane.xlu0 %689
          %v691 = vrcp.pop 16.0
          %v692 = vmul.f32 %v687, %v691
          %v693 = vmul.f32 %v690, %v691
          %v694 = vsub.f32 %v682, %v692
          %v695 = vsub.f32 %v683, %v693
          %v696 = vmul.f32 %v694, %v694
          %v697 = vmul.f32 %v695, %v695
          %v698 = vsel %vm684, %v696, 0.0
          %699 = vadd.xlane.f32.xlu0 %v698
          %v700 = vpop.xlane.xlu0 %699
          %v701 = vsel %vm684, %v697, 0.0
          %702 = vadd.xlane.f32.xlu0 %v701
          %v703 = vpop.xlane.xlu0 %702
          %v704 = vmul.f32 %v700, %v691
          %v705 = vmul.f32 %v703, %v691
          %v706 = vadd.f32 %v704, 1e-05
          %v707 = vadd.f32 %v705, 1e-05
          %v708 = vrsqrt.pop %v706
          %v709 = vmul.f32 %v706, %v708
          %vm710 = vcmp.eq.f32.partialorder %v706, inf
          %v711 = vsel %vm710, %v706, %v709
          %vm712 = vcmp.eq.f32.partialorder %v706, 0.0
          %v713 = vand.u32 %v706, 2147483648
          %v714 = vsel %vm712, %v713, %v711
          %v715 = vrsqrt.pop %v707
          %v716 = vmul.f32 %v707, %v715
          %vm717 = vcmp.eq.f32.partialorder %v707, inf
          %v718 = vsel %vm717, %v707, %v716
          %vm719 = vcmp.eq.f32.partialorder %v707, 0.0
          %v720 = vand.u32 %v707, 2147483648
          %v721 = vsel %vm719, %v720, %v718
          %vm722 = vcmask 7168
          %723 = vst.msk [vmem:[#allocation3] sm:$0xff] %vm722, %v692
          %724 = vst.msk [vmem:[#allocation3 + $0x8] sm:$0xff] %vm722, %v693
          %725 = vst.msk [vmem:[#allocation4] sm:$0xff] %vm722, %v714
          %726 = vst.msk [vmem:[#allocation4 + $0x8] sm:$0xff] %vm722, %v721
          %v727 = vrcp.pop %v714
          %v728 = vmul.f32 %v694, %v727
          %v729 = vrcp.pop %v721
          %v730 = vmul.f32 %v695, %v729
          %v731 = vpack.c.bf16 %v730, %v728
          %v732 = vld [vmem:[#allocation9] sm:$0xf]
          %v733 = vld [vmem:[#allocation9 + $0x4] sm:$0xf]
          %v734 = vld [vmem:[#allocation10] sm:$0x1]
          %v736 = vlaneseq
          %v737 = vshrl.u32 %v736, 7
          %v738 = vsub.s32 0, %v737
          %v739 = vrot.slane %v734, %v738
          %v743 = vunpack.c.l.b16 %v732
          %v744 = vunpack.c.l.b16 %v733
          %v745 = vpack.c.b16 %v744, %v743
          %v748 = vsel %vm684, %v731, 0
          %750 = vmatprep.subr.bf16.mxu0 0
          %751 = vmatpush1.bf16.msra.mxu0 %v745
          %752 = vmatprep.subr.bf16.mxu0 0
          %753 = vmatpush1.bf16.msra.mxu0 0
          %754 = vmatprep.subr.bf16.mxu0 0
          %755 = vmatpush1.bf16.msra.mxu0 0
          %756 = vmatprep.subr.bf16.mxu0 0
          %757 = vmatpush1.bf16.msra.mxu0 0
          %758 = vmatprep.subr.bf16.mxu0 0
          %759 = vmatpush1.bf16.msra.mxu0 0
          %760 = vmatprep.subr.bf16.mxu0 0
          %761 = vmatpush1.bf16.msra.mxu0 0
          %762 = vmatprep.subr.bf16.mxu0 0
          %763 = vmatpush1.bf16.msra.mxu0 0
          %764 = vmatprep.subr.bf16.mxu0 0
          %765 = vmatpush1.bf16.msra.mxu0 0
          %766 = vmatprep.subr.bf16.mxu0 0
          %767 = vmatpush1.bf16.msra.mxu0 0
          %768 = vmatprep.subr.bf16.mxu0 0
          %769 = vmatpush1.bf16.msra.mxu0 0
          %770 = vmatprep.subr.bf16.mxu0 0
          %771 = vmatpush1.bf16.msra.mxu0 0
          %772 = vmatprep.subr.bf16.mxu0 0
          %773 = vmatpush1.bf16.msra.mxu0 0
          %774 = vmatprep.subr.bf16.mxu0 0
          %775 = vmatpush1.bf16.msra.mxu0 0
          %776 = vmatprep.subr.bf16.mxu0 0
          %777 = vmatpush1.bf16.msra.mxu0 0
          %778 = vmatprep.subr.bf16.mxu0 0
          %779 = vmatpush1.bf16.msra.mxu0 0
          %780 = vmatprep.subr.bf16.mxu0 0
          %781 = vmatpush1.bf16.msra.mxu0 0
          %782 = vmatprep.mubr.bf16.mxu0 0
          %783 = vmatmul.mubr.bf16.gmra.mrb[0].mxu0 %v748
          %v784 = vpop.f32.mrb[0].mxu0
          %v785 = vadd.f32 %v739, %v784
          %v786 = vpop.f32.mrb[0].mxu0
          %v787 = vpop.f32.mrb[0].mxu0
          %v788 = vadd.f32 %v739, %v787
          %v789 = vpop.f32.mrb[0].mxu0
          %790 = vdwg.mxu0
          %v793 = vcombine.high %v785, %v785
          %v795 = vunpack.c.l.s4 1966171168
          %v796 = vunpack.c.0.s8 %v795
          %v797 = vlaneseq
          %v798 = vshrl.u32 %v797, 7
          %v799 = vsub.s32 %v796, %v798
          %v800 = vrot.slane %v785, %v799
          %v802 = vunpack.c.l.s4 1966171168
          %v803 = vunpack.c.0.s8 %v802
          %v804 = vlaneseq
          %v805 = vshrl.u32 %v804, 7
          %v806 = vsub.s32 %v803, %v805
          %v807 = vrot.slane %v793, %v806
          %v808 = vcombine.high %v800, %v800
          %v809 = vcombine.high %v807, %v807
          %v811 = vunpack.c.l.s4 1966171168
          %v812 = vunpack.c.0.s8 %v811
          %v813 = vlaneseq
          %v814 = vshrl.u32 %v813, 7
          %v815 = vsub.s32 %v812, %v814
          %v816 = vrot.slane %v800, %v815
          %v818 = vunpack.c.l.s4 1966171168
          %v819 = vunpack.c.0.s8 %v818
          %v820 = vlaneseq
          %v821 = vshrl.u32 %v820, 7
          %v822 = vsub.s32 %v819, %v821
          %v823 = vrot.slane %v807, %v822
          %v825 = vunpack.c.l.s4 1966171168
          %v826 = vunpack.c.0.s8 %v825
          %v827 = vlaneseq
          %v828 = vshrl.u32 %v827, 7
          %v829 = vsub.s32 %v826, %v828
          %v830 = vrot.slane %v808, %v829
          %v832 = vunpack.c.l.s4 1966171168
          %v833 = vunpack.c.0.s8 %v832
          %v834 = vlaneseq
          %v835 = vshrl.u32 %v834, 7
          %v836 = vsub.s32 %v833, %v835
          %v837 = vrot.slane %v809, %v836
          %v838 = vcombine.high %v816, %v816
          %v839 = vcombine.high %v823, %v823
          %v840 = vcombine.high %v830, %v830
          %v841 = vcombine.high %v837, %v837
          %v842 = vcombine.high %v788, %v788
          %v844 = vunpack.c.l.s4 1966171168
          %v845 = vunpack.c.0.s8 %v844
          %v846 = vlaneseq
          %v847 = vshrl.u32 %v846, 7
          %v848 = vsub.s32 %v845, %v847
          %v849 = vrot.slane %v788, %v848
          %v851 = vunpack.c.l.s4 1966171168
          %v852 = vunpack.c.0.s8 %v851
          %v853 = vlaneseq
          %v854 = vshrl.u32 %v853, 7
          %v855 = vsub.s32 %v852, %v854
          %v856 = vrot.slane %v842, %v855
          %v857 = vcombine.high %v849, %v849
          %v858 = vcombine.high %v856, %v856
          %v860 = vunpack.c.l.s4 1966171168
          %v861 = vunpack.c.0.s8 %v860
          %v862 = vlaneseq
          %v863 = vshrl.u32 %v862, 7
          %v864 = vsub.s32 %v861, %v863
          %v865 = vrot.slane %v849, %v864
          %v867 = vunpack.c.l.s4 1966171168
          %v868 = vunpack.c.0.s8 %v867
          %v869 = vlaneseq
          %v870 = vshrl.u32 %v869, 7
          %v871 = vsub.s32 %v868, %v870
          %v872 = vrot.slane %v856, %v871
          %v874 = vunpack.c.l.s4 1966171168
          %v875 = vunpack.c.0.s8 %v874
          %v876 = vlaneseq
          %v877 = vshrl.u32 %v876, 7
          %v878 = vsub.s32 %v875, %v877
          %v879 = vrot.slane %v857, %v878
          %v881 = vunpack.c.l.s4 1966171168
          %v882 = vunpack.c.0.s8 %v881
          %v883 = vlaneseq
          %v884 = vshrl.u32 %v883, 7
          %v885 = vsub.s32 %v882, %v884
          %v886 = vrot.slane %v858, %v885
          %v887 = vcombine.high %v865, %v865
          %v888 = vcombine.high %v872, %v872
          %v889 = vcombine.high %v879, %v879
          %v890 = vcombine.high %v886, %v886
          %v891 = vld [vmem:[#allocation7] sm:$0xff]
          %v892 = vld [vmem:[#allocation7 + $0x8] sm:$0xff]
          %v893 = vld [vmem:[#allocation7 + $0x10] sm:$0xff]
          %v894 = vld [vmem:[#allocation7 + $0x18] sm:$0xff]
          %v895 = vld [vmem:[#allocation7 + $0x20] sm:$0xff]
          %v896 = vld [vmem:[#allocation7 + $0x28] sm:$0xff]
          %v897 = vld [vmem:[#allocation7 + $0x30] sm:$0xff]
          %v898 = vld [vmem:[#allocation7 + $0x38] sm:$0xff]
          %v899 = vlaneseq
          %v900 = vshrl.u32 %v899, 7
          %v901 = vsub.s32 0, %v900
          %v902 = vrot.slane %v816, %v901
          %v903 = vlaneseq
          %v904 = vshrl.u32 %v903, 7
          %v905 = vsub.s32 0, %v904
          %v906 = vrot.slane %v830, %v905
          %v907 = vlaneseq
          %v908 = vshrl.u32 %v907, 7
          %v909 = vsub.s32 0, %v908
          %v910 = vrot.slane %v838, %v909
          %v911 = vlaneseq
          %v912 = vshrl.u32 %v911, 7
          %v913 = vsub.s32 0, %v912
          %v914 = vrot.slane %v840, %v913
          %v915 = vlaneseq
          %v916 = vshrl.u32 %v915, 7
          %v917 = vsub.s32 0, %v916
          %v918 = vrot.slane %v823, %v917
          %v919 = vlaneseq
          %v920 = vshrl.u32 %v919, 7
          %v921 = vsub.s32 0, %v920
          %v922 = vrot.slane %v837, %v921
          %v923 = vlaneseq
          %v924 = vshrl.u32 %v923, 7
          %v925 = vsub.s32 0, %v924
          %v926 = vrot.slane %v839, %v925
          %v927 = vlaneseq
          %v928 = vshrl.u32 %v927, 7
          %v929 = vsub.s32 0, %v928
          %v930 = vrot.slane %v841, %v929
          %v931 = vlaneseq
          %v932 = vshrl.u32 %v931, 7
          %v933 = vsub.s32 0, %v932
          %v934 = vrot.slane %v865, %v933
          %v935 = vlaneseq
          %v936 = vshrl.u32 %v935, 7
          %v937 = vsub.s32 0, %v936
          %v938 = vrot.slane %v879, %v937
          %v939 = vlaneseq
          %v940 = vshrl.u32 %v939, 7
          %v941 = vsub.s32 0, %v940
          %v942 = vrot.slane %v887, %v941
          %v943 = vlaneseq
          %v944 = vshrl.u32 %v943, 7
          %v945 = vsub.s32 0, %v944
          %v946 = vrot.slane %v889, %v945
          %v947 = vlaneseq
          %v948 = vshrl.u32 %v947, 7
          %v949 = vsub.s32 0, %v948
          %v950 = vrot.slane %v872, %v949
          %v951 = vlaneseq
          %v952 = vshrl.u32 %v951, 7
          %v953 = vsub.s32 0, %v952
          %v954 = vrot.slane %v886, %v953
          %v955 = vlaneseq
          %v956 = vshrl.u32 %v955, 7
          %v957 = vsub.s32 0, %v956
          %v958 = vrot.slane %v888, %v957
          %v959 = vlaneseq
          %v960 = vshrl.u32 %v959, 7
          %v961 = vsub.s32 0, %v960
          %v962 = vrot.slane %v890, %v961
          %v979 = vmul.f32 %v902, %v891
          %v980 = vmul.f32 %v906, %v892
          %v981 = vmul.f32 %v910, %v893
          %v982 = vmul.f32 %v914, %v894
          %v983 = vmul.f32 %v918, %v895
          %v984 = vmul.f32 %v922, %v896
          %v985 = vmul.f32 %v926, %v897
          %v986 = vmul.f32 %v930, %v898
          %v987 = vmul.f32 %v934, %v891
          %v988 = vmul.f32 %v938, %v892
          %v989 = vmul.f32 %v942, %v893
          %v990 = vmul.f32 %v946, %v894
          %v991 = vmul.f32 %v950, %v895
          %v992 = vmul.f32 %v954, %v896
          %v993 = vmul.f32 %v958, %v897
          %v994 = vmul.f32 %v962, %v898
          %vm995 = vcmask 195584
          %v996 = vsel %vm995, %v979, 0.0
          %997 = vadd.xlane.f32.xlu0 %v996
          %v998 = vpop.xlane.xlu0 %997
          %v999 = vsel %vm995, %v980, 0.0
          %1000 = vadd.xlane.f32.xlu0 %v999
          %v1001 = vpop.xlane.xlu0 %1000
          %v1002 = vsel %vm995, %v981, 0.0
          %1003 = vadd.xlane.f32.xlu0 %v1002
          %v1004 = vpop.xlane.xlu0 %1003
          %v1005 = vsel %vm995, %v982, 0.0
          %1006 = vadd.xlane.f32.xlu0 %v1005
          %v1007 = vpop.xlane.xlu0 %1006
          %v1008 = vsel %vm995, %v983, 0.0
          %1009 = vadd.xlane.f32.xlu0 %v1008
          %v1010 = vpop.xlane.xlu0 %1009
          %v1011 = vsel %vm995, %v984, 0.0
          %1012 = vadd.xlane.f32.xlu0 %v1011
          %v1013 = vpop.xlane.xlu0 %1012
          %v1014 = vsel %vm995, %v985, 0.0
          %1015 = vadd.xlane.f32.xlu0 %v1014
          %v1016 = vpop.xlane.xlu0 %1015
          %v1017 = vsel %vm995, %v986, 0.0
          %1018 = vadd.xlane.f32.xlu0 %v1017
          %v1019 = vpop.xlane.xlu0 %1018
          %v1020 = vsel %vm995, %v987, 0.0
          %1021 = vadd.xlane.f32.xlu0 %v1020
          %v1022 = vpop.xlane.xlu0 %1021
          %v1023 = vsel %vm995, %v988, 0.0
          %1024 = vadd.xlane.f32.xlu0 %v1023
          %v1025 = vpop.xlane.xlu0 %1024
          %v1026 = vsel %vm995, %v989, 0.0
          %1027 = vadd.xlane.f32.xlu0 %v1026
          %v1028 = vpop.xlane.xlu0 %1027
          %v1029 = vsel %vm995, %v990, 0.0
          %1030 = vadd.xlane.f32.xlu0 %v1029
          %v1031 = vpop.xlane.xlu0 %1030
          %v1032 = vsel %vm995, %v991, 0.0
          %1033 = vadd.xlane.f32.xlu0 %v1032
          %v1034 = vpop.xlane.xlu0 %1033
          %v1035 = vsel %vm995, %v992, 0.0
          %1036 = vadd.xlane.f32.xlu0 %v1035
          %v1037 = vpop.xlane.xlu0 %1036
          %v1038 = vsel %vm995, %v993, 0.0
          %1039 = vadd.xlane.f32.xlu0 %v1038
          %v1040 = vpop.xlane.xlu0 %1039
          %v1041 = vsel %vm995, %v994, 0.0
          %1042 = vadd.xlane.f32.xlu0 %v1041
          %v1043 = vpop.xlane.xlu0 %1042
          %v1060 = vlaneseq
          %v1061 = vand.u32 %v1060, 127
          %v1062 = vadd.s32 %v1061, 4294967272
          %v1063 = vlaneseq
          %v1064 = vshrl.u32 %v1063, 7
          %v1065 = vsub.s32 %v1062, %v1064
          %v1066 = vrot.slane %v998, %v1065
          %v1067 = vlaneseq
          %v1068 = vshrl.u32 %v1067, 7
          %v1069 = vsub.s32 %v1062, %v1068
          %v1070 = vrot.slane %v1001, %v1069
          %v1071 = vlaneseq
          %v1072 = vshrl.u32 %v1071, 7
          %v1073 = vsub.s32 %v1062, %v1072
          %v1074 = vrot.slane %v1004, %v1073
          %v1075 = vlaneseq
          %v1076 = vshrl.u32 %v1075, 7
          %v1077 = vsub.s32 %v1062, %v1076
          %v1078 = vrot.slane %v1007, %v1077
          %v1079 = vlaneseq
          %v1080 = vshrl.u32 %v1079, 7
          %v1081 = vsub.s32 %v1062, %v1080
          %v1082 = vrot.slane %v1010, %v1081
          %v1083 = vlaneseq
          %v1084 = vshrl.u32 %v1083, 7
          %v1085 = vsub.s32 %v1062, %v1084
          %v1086 = vrot.slane %v1013, %v1085
          %v1087 = vlaneseq
          %v1088 = vshrl.u32 %v1087, 7
          %v1089 = vsub.s32 %v1062, %v1088
          %v1090 = vrot.slane %v1016, %v1089
          %v1091 = vlaneseq
          %v1092 = vshrl.u32 %v1091, 7
          %v1093 = vsub.s32 %v1062, %v1092
          %v1094 = vrot.slane %v1019, %v1093
          %v1095 = vlaneseq
          %v1096 = vshrl.u32 %v1095, 7
          %v1097 = vsub.s32 %v1062, %v1096
          %v1098 = vrot.slane %v1022, %v1097
          %v1099 = vlaneseq
          %v1100 = vshrl.u32 %v1099, 7
          %v1101 = vsub.s32 %v1062, %v1100
          %v1102 = vrot.slane %v1025, %v1101
          %v1103 = vlaneseq
          %v1104 = vshrl.u32 %v1103, 7
          %v1105 = vsub.s32 %v1062, %v1104
          %v1106 = vrot.slane %v1028, %v1105
          %v1107 = vlaneseq
          %v1108 = vshrl.u32 %v1107, 7
          %v1109 = vsub.s32 %v1062, %v1108
          %v1110 = vrot.slane %v1031, %v1109
          %v1111 = vlaneseq
          %v1112 = vshrl.u32 %v1111, 7
          %v1113 = vsub.s32 %v1062, %v1112
          %v1114 = vrot.slane %v1034, %v1113
          %v1115 = vlaneseq
          %v1116 = vshrl.u32 %v1115, 7
          %v1117 = vsub.s32 %v1062, %v1116
          %v1118 = vrot.slane %v1037, %v1117
          %v1119 = vlaneseq
          %v1120 = vshrl.u32 %v1119, 7
          %v1121 = vsub.s32 %v1062, %v1120
          %v1122 = vrot.slane %v1040, %v1121
          %v1123 = vlaneseq
          %v1124 = vshrl.u32 %v1123, 7
          %v1125 = vsub.s32 %v1062, %v1124
          %v1126 = vrot.slane %v1043, %v1125
          %vm1127 = vcmask 1041409
          %v1128 = vsel %vm1127, %v1070, %v1066
          %vm1129 = vcmask 1042434
          %v1130 = vsel %vm1129, %v1074, %v1128
          %vm1131 = vcmask 1043459
          %v1132 = vsel %vm1131, %v1078, %v1130
          %vm1133 = vcmask 1044484
          %v1134 = vsel %vm1133, %v1082, %v1132
          %vm1135 = vcmask 1045509
          %v1136 = vsel %vm1135, %v1086, %v1134
          %vm1137 = vcmask 1046534
          %v1138 = vsel %vm1137, %v1090, %v1136
          %vm1139 = vcmask 1047559
          %v1140 = vsel %vm1139, %v1094, %v1138
          %v1141 = vsel %vm1127, %v1102, %v1098
          %v1142 = vsel %vm1129, %v1106, %v1141
          %v1143 = vsel %vm1131, %v1110, %v1142
          %v1144 = vsel %vm1133, %v1114, %v1143
          %v1145 = vsel %vm1135, %v1118, %v1144
          %v1146 = vsel %vm1137, %v1122, %v1145
          %v1147 = vsel %vm1139, %v1126, %v1146
          %v1150 = vsel %vm995, %v785, %v1140
          %v1151 = vsel %vm995, %v788, %v1147
          %vm1152 = vcmask 261120
          %1153 = vst.msk [vmem:[#allocation2] sm:$0xff] %vm1152, %v1150
          %1154 = vst.msk [vmem:[#allocation2 + $0x8] sm:$0xff] %vm1152, %v1151
        $region100: #{tpu_custom_call.1} parent=75 // pred_fallthru
          _
        %v1155 = vld [vmem:[#allocation2] sm:$0xff]
        %v1156 = vld [vmem:[#allocation2 + $0x8] sm:$0xff]
        %v1157 = vpack.c.bf16 %v1156, %v1155
        %v1158 = vld [vmem:[%s647] sm:$0xf]
        %v1159 = vld [vmem:[%s647 + $0x4] sm:$0xf]
        %v1160 = vld [vmem:[%s647 + $0x8] sm:$0xf]
        %v1161 = vld [vmem:[%s647 + $0xc] sm:$0xf]
        %v1162 = vld [vmem:[%s650] sm:$0x1]
        %v1164 = vlaneseq
        %v1165 = vshrl.u32 %v1164, 7
        %v1166 = vsub.s32 0, %v1165
        %v1167 = vrot.slane %v1162, %v1166
        %v1173 = vunpack.c.l.b16 %v1158
        %v1174 = vunpack.c.l.b16 %v1159
        %v1175 = vunpack.c.l.b16 %v1160
        %v1176 = vunpack.c.l.b16 %v1161
        %v1177 = vpack.c.b16 %v1174, %v1173
        %v1178 = vpack.c.b16 %v1176, %v1175
        %vm1181 = vcmask 261120
        %v1183 = vsel %vm1181, %v1157, 0
        %1185 = vmatprep.subr.bf16.mxu0 0
        %1186 = vmatpush1.bf16.msra.mxu0 %v1177
        %1187 = vmatprep.subr.bf16.mxu0 0
        %1188 = vmatpush1.bf16.msra.mxu0 %v1178
        %1189 = vmatprep.subr.bf16.mxu0 0
        %1190 = vmatpush1.bf16.msra.mxu0 0
        %1191 = vmatprep.subr.bf16.mxu0 0
        %1192 = vmatpush1.bf16.msra.mxu0 0
        %1193 = vmatprep.subr.bf16.mxu0 0
        %1194 = vmatpush1.bf16.msra.mxu0 0
        %1195 = vmatprep.subr.bf16.mxu0 0
        %1196 = vmatpush1.bf16.msra.mxu0 0
        %1197 = vmatprep.subr.bf16.mxu0 0
        %1198 = vmatpush1.bf16.msra.mxu0 0
        %1199 = vmatprep.subr.bf16.mxu0 0
        %1200 = vmatpush1.bf16.msra.mxu0 0
        %1201 = vmatprep.subr.bf16.mxu0 0
        %1202 = vmatpush1.bf16.msra.mxu0 0
        %1203 = vmatprep.subr.bf16.mxu0 0
        %1204 = vmatpush1.bf16.msra.mxu0 0
        %1205 = vmatprep.subr.bf16.mxu0 0
        %1206 = vmatpush1.bf16.msra.mxu0 0
        %1207 = vmatprep.subr.bf16.mxu0 0
        %1208 = vmatpush1.bf16.msra.mxu0 0
        %1209 = vmatprep.subr.bf16.mxu0 0
        %1210 = vmatpush1.bf16.msra.mxu0 0
        %1211 = vmatprep.subr.bf16.mxu0 0
        %1212 = vmatpush1.bf16.msra.mxu0 0
        %1213 = vmatprep.subr.bf16.mxu0 0
        %1214 = vmatpush1.bf16.msra.mxu0 0
        %1215 = vmatprep.subr.bf16.mxu0 0
        %1216 = vmatpush1.bf16.msra.mxu0 0
        %1217 = vmatprep.mubr.bf16.mxu0 0
        %1218 = vmatmul.mubr.bf16.gmra.mrb[0].mxu0 %v1183
        %v1219 = vpop.f32.mrb[0].mxu0
        %v1220 = vadd.f32 %v1167, %v1219
        %v1221 = vpop.f32.mrb[0].mxu0
        %v1222 = vpop.f32.mrb[0].mxu0
        %v1223 = vadd.f32 %v1167, %v1222
        %v1224 = vpop.f32.mrb[0].mxu0
        %1225 = vdwg.mxu0
        %v1226 = vmax.f32 %v1220, 0.0
        %v1227 = vmax.f32 %v1223, 0.0
        %v1228 = vpack.c.bf16 %v1227, %v1226
        %v1229 = vld [vmem:[%s655] sm:$0xf]
        %v1230 = vld [vmem:[%s655 + $0x4] sm:$0xf]
        %v1231 = vld [vmem:[%s655 + $0x8] sm:$0xf]
        %v1232 = vld [vmem:[%s655 + $0xc] sm:$0xf]
        %v1237 = vunpack.c.l.b16 %v1229
        %v1238 = vunpack.c.l.b16 %v1230
        %v1239 = vunpack.c.l.b16 %v1231
        %v1240 = vunpack.c.l.b16 %v1232
        %v1241 = vpack.c.b16 %v1238, %v1237
        %v1242 = vpack.c.b16 %v1240, %v1239
        %v1246 = vsel %vm1181, %v1228, 0
        %1248 = vmatprep.subr.bf16.mxu0 0
        %1249 = vmatpush1.bf16.msra.mxu0 %v1241
        %1250 = vmatprep.subr.bf16.mxu0 0
        %1251 = vmatpush1.bf16.msra.mxu0 %v1242
        %1252 = vmatprep.subr.bf16.mxu0 0
        %1253 = vmatpush1.bf16.msra.mxu0 0
        %1254 = vmatprep.subr.bf16.mxu0 0
        %1255 = vmatpush1.bf16.msra.mxu0 0
        %1256 = vmatprep.subr.bf16.mxu0 0
        %1257 = vmatpush1.bf16.msra.mxu0 0
        %1258 = vmatprep.subr.bf16.mxu0 0
        %1259 = vmatpush1.bf16.msra.mxu0 0
        %1260 = vmatprep.subr.bf16.mxu0 0
        %1261 = vmatpush1.bf16.msra.mxu0 0
        %1262 = vmatprep.subr.bf16.mxu0 0
        %1263 = vmatpush1.bf16.msra.mxu0 0
        %1264 = vmatprep.subr.bf16.mxu0 0
        %1265 = vmatpush1.bf16.msra.mxu0 0
        %1266 = vmatprep.subr.bf16.mxu0 0
        %1267 = vmatpush1.bf16.msra.mxu0 0
        %1268 = vmatprep.subr.bf16.mxu0 0
        %1269 = vmatpush1.bf16.msra.mxu0 0
        %1270 = vmatprep.subr.bf16.mxu0 0
        %1271 = vmatpush1.bf16.msra.mxu0 0
        %1272 = vmatprep.subr.bf16.mxu0 0
        %1273 = vmatpush1.bf16.msra.mxu0 0
        %1274 = vmatprep.subr.bf16.mxu0 0
        %1275 = vmatpush1.bf16.msra.mxu0 0
        %1276 = vmatprep.subr.bf16.mxu0 0
        %1277 = vmatpush1.bf16.msra.mxu0 0
        %1278 = vmatprep.subr.bf16.mxu0 0
        %1279 = vmatpush1.bf16.msra.mxu0 0
        %1280 = vmatprep.mubr.bf16.mxu0 0
        %1281 = vmatmul.mubr.bf16.gmra.mrb[0].mxu0 %v1246
        %v1282 = vpop.f32.mrb[0].mxu0
        %v1283 = vadd.f32 0.0, %v1282
        %v1284 = vpop.f32.mrb[0].mxu0
        %v1285 = vpop.f32.mrb[0].mxu0
        %v1286 = vadd.f32 0.0, %v1285
        %v1287 = vpop.f32.mrb[0].mxu0
        %1288 = vdwg.mxu0
        %v1289 = vadd.f32 %v1155, %v1283
        %v1290 = vadd.f32 %v1156, %v1286
        %v1291 = vld [vmem:[%s570] sm:$0x1]
        %v1293 = vlaneseq
        %v1294 = vshrl.u32 %v1293, 7
        %v1295 = vsub.s32 0, %v1294
        %v1296 = vrot.slane %v1291, %v1295
        %v1298 = vadd.f32 %v1289, %v1296
        %v1299 = vadd.f32 %v1290, %v1296
        %1300 = vxpose.xlu0.b32.start [1/16] %v1298, 128
        %1301 = vxpose.xlu0.b32.cont [2/16] 0.0, 128
        %1302 = vxpose.xlu0.b32.cont [3/16] 0.0, 128
        %1303 = vxpose.xlu0.b32.cont [4/16] 0.0, 128
        %1304 = vxpose.xlu0.b32.cont [5/16] 0.0, 128
        %1305 = vxpose.xlu0.b32.cont [6/16] 0.0, 128
        %1306 = vxpose.xlu0.b32.cont [7/16] 0.0, 128
        %1307 = vxpose.xlu0.b32.cont [8/16] 0.0, 128
        %1308 = vxpose.xlu0.b32.cont [9/16] 0.0, 128
        %1309 = vxpose.xlu0.b32.cont [10/16] 0.0, 128
        %1310 = vxpose.xlu0.b32.cont [11/16] 0.0, 128
        %1311 = vxpose.xlu0.b32.cont [12/16] 0.0, 128
        %1312 = vxpose.xlu0.b32.cont [13/16] 0.0, 128
        %1313 = vxpose.xlu0.b32.cont [14/16] 0.0, 128
        %1314 = vxpose.xlu0.b32.cont [15/16] 0.0, 128
        %1315 = vxpose.xlu0.b32.end [16/16] 0.0, 128
        %v1316 = vpop.trf.xlu0
        %v1317 = vpop.trf.xlu0
        %v1318 = vpop.trf.xlu0
        %v1319 = vpop.trf.xlu0
        %v1320 = vpop.trf.xlu0
        %v1321 = vpop.trf.xlu0
        %v1322 = vpop.trf.xlu0
        %v1323 = vpop.trf.xlu0
        %v1324 = vpop.trf.xlu0
        %v1325 = vpop.trf.xlu0
        %v1326 = vpop.trf.xlu0
        %v1327 = vpop.trf.xlu0
        %v1328 = vpop.trf.xlu0
        %v1329 = vpop.trf.xlu0
        %v1330 = vpop.trf.xlu0
        %v1331 = vpop.trf.xlu0
        %1332 = vxpose.xlu0.b32.start [1/16] %v1299, 128
        %1333 = vxpose.xlu0.b32.cont [2/16] 0.0, 128
        %1334 = vxpose.xlu0.b32.cont [3/16] 0.0, 128
        %1335 = vxpose.xlu0.b32.cont [4/16] 0.0, 128
        %1336 = vxpose.xlu0.b32.cont [5/16] 0.0, 128
        %1337 = vxpose.xlu0.b32.cont [6/16] 0.0, 128
        %1338 = vxpose.xlu0.b32.cont [7/16] 0.0, 128
        %1339 = vxpose.xlu0.b32.cont [8/16] 0.0, 128
        %1340 = vxpose.xlu0.b32.cont [9/16] 0.0, 128
        %1341 = vxpose.xlu0.b32.cont [10/16] 0.0, 128
        %1342 = vxpose.xlu0.b32.cont [11/16] 0.0, 128
        %1343 = vxpose.xlu0.b32.cont [12/16] 0.0, 128
        %1344 = vxpose.xlu0.b32.cont [13/16] 0.0, 128
        %1345 = vxpose.xlu0.b32.cont [14/16] 0.0, 128
        %1346 = vxpose.xlu0.b32.cont [15/16] 0.0, 128
        %1347 = vxpose.xlu0.b32.end [16/16] 0.0, 128
        %v1348 = vpop.trf.xlu0
        %v1349 = vpop.trf.xlu0
        %v1350 = vpop.trf.xlu0
        %v1351 = vpop.trf.xlu0
        %v1352 = vpop.trf.xlu0
        %v1353 = vpop.trf.xlu0
        %v1354 = vpop.trf.xlu0
        %v1355 = vpop.trf.xlu0
        %v1356 = vpop.trf.xlu0
        %v1357 = vpop.trf.xlu0
        %v1358 = vpop.trf.xlu0
        %v1359 = vpop.trf.xlu0
        %v1360 = vpop.trf.xlu0
        %v1361 = vpop.trf.xlu0
        %v1362 = vpop.trf.xlu0
        %v1363 = vpop.trf.xlu0
        %v1364 = vpack.c.bf16 %v1317, %v1316
        %v1365 = vpack.c.bf16 %v1319, %v1318
        %v1366 = vpack.c.bf16 %v1349, %v1348
        %v1367 = vpack.c.bf16 %v1351, %v1350
        %v1368 = vld [vmem:[%s659] sm:$0xf]
        %v1369 = vld [vmem:[%s662] sm:$0x1]
        %v1371 = vlaneseq
        %v1372 = vshrl.u32 %v1371, 7
        %v1373 = vsub.s32 0, %v1372
        %v1374 = vrot.slane %v1369, %v1373
        %vm1376 = vcmask 64512
        %v1378 = vsel %vm1376, %v1364, 0
        %v1381 = vsel %vm1376, %v1365, 0
        %v1384 = vsel %vm1376, %v1366, 0
        %v1387 = vsel %vm1376, %v1367, 0
        %vm1389 = vcmask 1043456
        %v1391 = vsel %vm1389, %v1368, 0
        %1393 = vmatprep.subr.bf16.mxu0 0
        %1394 = vmatpush1.bf16.msra.mxu0 %v1391
        %1395 = vmatprep.subr.bf16.mxu0 0
        %1396 = vmatpush1.bf16.msra.mxu0 0
        %1397 = vmatprep.subr.bf16.mxu0 0
        %1398 = vmatpush1.bf16.msra.mxu0 0
        %1399 = vmatprep.subr.bf16.mxu0 0
        %1400 = vmatpush1.bf16.msra.mxu0 0
        %1401 = vmatprep.subr.bf16.mxu0 0
        %1402 = vmatpush1.bf16.msra.mxu0 0
        %1403 = vmatprep.subr.bf16.mxu0 0
        %1404 = vmatpush1.bf16.msra.mxu0 0
        %1405 = vmatprep.subr.bf16.mxu0 0
        %1406 = vmatpush1.bf16.msra.mxu0 0
        %1407 = vmatprep.subr.bf16.mxu0 0
        %1408 = vmatpush1.bf16.msra.mxu0 0
        %1409 = vmatprep.subr.bf16.mxu0 0
        %1410 = vmatpush1.bf16.msra.mxu0 0
        %1411 = vmatprep.subr.bf16.mxu0 0
        %1412 = vmatpush1.bf16.msra.mxu0 0
        %1413 = vmatprep.subr.bf16.mxu0 0
        %1414 = vmatpush1.bf16.msra.mxu0 0
        %1415 = vmatprep.subr.bf16.mxu0 0
        %1416 = vmatpush1.bf16.msra.mxu0 0
        %1417 = vmatprep.subr.bf16.mxu0 0
        %1418 = vmatpush1.bf16.msra.mxu0 0
        %1419 = vmatprep.subr.bf16.mxu0 0
        %1420 = vmatpush1.bf16.msra.mxu0 0
        %1421 = vmatprep.subr.bf16.mxu0 0
        %1422 = vmatpush1.bf16.msra.mxu0 0
        %1423 = vmatprep.subr.bf16.mxu0 0
        %1424 = vmatpush1.bf16.msra.mxu0 0
        %1425 = vmatprep.mubr.bf16.mxu0 0
        %1426 = vmatmul.mubr.bf16.gmra.mrb[0].mxu0 %v1378
        %v1427 = vpop.f32.mrb[0].mxu0
        %v1428 = vadd.f32 %v1374, %v1427
        %v1429 = vpop.f32.mrb[0].mxu0
        %v1430 = vpop.f32.mrb[0].mxu0
        %v1431 = vadd.f32 %v1374, %v1430
        %v1432 = vpop.f32.mrb[0].mxu0
        %1433 = vmatprep.mubr.bf16.mxu0 0
        %1434 = vmatmul.mubr.bf16.gmra.mrb[0].mxu0 %v1381
        %v1435 = vpop.f32.mrb[0].mxu0
        %v1436 = vadd.f32 %v1374, %v1435
        %v1437 = vpop.f32.mrb[0].mxu0
        %v1438 = vpop.f32.mrb[0].mxu0
        %v1439 = vadd.f32 %v1374, %v1438
        %v1440 = vpop.f32.mrb[0].mxu0
        %1441 = vmatprep.mubr.bf16.mxu0 0
        %1442 = vmatmul.mubr.bf16.gmra.mrb[0].mxu0 %v1384
        %v1443 = vpop.f32.mrb[0].mxu0
        %v1444 = vadd.f32 %v1374, %v1443
        %v1445 = vpop.f32.mrb[0].mxu0
        %v1446 = vpop.f32.mrb[0].mxu0
        %v1447 = vadd.f32 %v1374, %v1446
        %v1448 = vpop.f32.mrb[0].mxu0
        %1449 = vmatprep.mubr.bf16.mxu0 0
        %1450 = vmatmul.mubr.bf16.gmra.mrb[0].mxu0 %v1387
        %v1451 = vpop.f32.mrb[0].mxu0
        %v1452 = vadd.f32 %v1374, %v1451
        %v1453 = vpop.f32.mrb[0].mxu0
        %v1454 = vpop.f32.mrb[0].mxu0
        %v1455 = vadd.f32 %v1374, %v1454
        %v1456 = vpop.f32.mrb[0].mxu0
        %1457 = vdwg.mxu0
        %v1458 = vmax.f32 %v1428, 0.0
        %v1459 = vmax.f32 %v1431, 0.0
        %v1460 = vmax.f32 %v1436, 0.0
        %v1461 = vmax.f32 %v1439, 0.0
        %v1462 = vmax.f32 %v1444, 0.0
        %v1463 = vmax.f32 %v1447, 0.0
        %v1464 = vmax.f32 %v1452, 0.0
        %v1465 = vmax.f32 %v1455, 0.0
        %v1466 = vpack.c.bf16 %v1459, %v1458
        %v1467 = vpack.c.bf16 %v1461, %v1460
        %v1468 = vpack.c.bf16 %v1463, %v1462
        %v1469 = vpack.c.bf16 %v1465, %v1464
        %v1470 = vld [vmem:[%s667] sm:$0xf]
        %v1471 = vld [vmem:[%s667 + $0x4] sm:$0xf]
        %v1472 = vld [vmem:[%s667 + $0x8] sm:$0xf]
        %v1473 = vld [vmem:[%s667 + $0xc] sm:$0xf]
        %v1474 = vld [vmem:[%s670] sm:$0x1]
        %v1476 = vlaneseq
        %v1477 = vshrl.u32 %v1476, 7
        %v1478 = vsub.s32 0, %v1477
        %v1479 = vrot.slane %v1474, %v1478
        %v1485 = vunpack.c.l.b16 %v1470
        %v1486 = vunpack.c.l.b16 %v1471
        %v1487 = vunpack.c.l.b16 %v1472
        %v1488 = vunpack.c.l.b16 %v1473
        %v1489 = vpack.c.b16 %v1486, %v1485
        %v1490 = vpack.c.b16 %v1488, %v1487
        %v1494 = vsel %vm1181, %v1466, 0
        %v1497 = vsel %vm1181, %v1467, 0
        %v1500 = vsel %vm1181, %v1468, 0
        %v1503 = vsel %vm1181, %v1469, 0
        %1505 = vmatprep.subr.bf16.mxu0 0
        %1506 = vmatpush1.bf16.msra.mxu0 %v1489
        %1507 = vmatprep.subr.bf16.mxu0 0
        %1508 = vmatpush1.bf16.msra.mxu0 %v1490
        %1509 = vmatprep.subr.bf16.mxu0 0
        %1510 = vmatpush1.bf16.msra.mxu0 0
        %1511 = vmatprep.subr.bf16.mxu0 0
        %1512 = vmatpush1.bf16.msra.mxu0 0
        %1513 = vmatprep.subr.bf16.mxu0 0
        %1514 = vmatpush1.bf16.msra.mxu0 0
        %1515 = vmatprep.subr.bf16.mxu0 0
        %1516 = vmatpush1.bf16.msra.mxu0 0
        %1517 = vmatprep.subr.bf16.mxu0 0
        %1518 = vmatpush1.bf16.msra.mxu0 0
        %1519 = vmatprep.subr.bf16.mxu0 0
        %1520 = vmatpush1.bf16.msra.mxu0 0
        %1521 = vmatprep.subr.bf16.mxu0 0
        %1522 = vmatpush1.bf16.msra.mxu0 0
        %1523 = vmatprep.subr.bf16.mxu0 0
        %1524 = vmatpush1.bf16.msra.mxu0 0
        %1525 = vmatprep.subr.bf16.mxu0 0
        %1526 = vmatpush1.bf16.msra.mxu0 0
        %1527 = vmatprep.subr.bf16.mxu0 0
        %1528 = vmatpush1.bf16.msra.mxu0 0
        %1529 = vmatprep.subr.bf16.mxu0 0
        %1530 = vmatpush1.bf16.msra.mxu0 0
        %1531 = vmatprep.subr.bf16.mxu0 0
        %1532 = vmatpush1.bf16.msra.mxu0 0
        %1533 = vmatprep.subr.bf16.mxu0 0
        %1534 = vmatpush1.bf16.msra.mxu0 0
        %1535 = vmatprep.subr.bf16.mxu0 0
        %1536 = vmatpush1.bf16.msra.mxu0 0
        %1537 = vmatprep.mubr.bf16.mxu0 0
        %1538 = vmatmul.mubr.bf16.gmra.mrb[0].mxu0 %v1494
        %v1539 = vpop.f32.mrb[0].mxu0
        %v1540 = vadd.f32 %v1479, %v1539
        %v1541 = vpop.f32.mrb[0].mxu0
        %v1542 = vpop.f32.mrb[0].mxu0
        %v1543 = vadd.f32 %v1479, %v1542
        %v1544 = vpop.f32.mrb[0].mxu0
        %1545 = vmatprep.mubr.bf16.mxu0 0
        %1546 = vmatmul.mubr.bf16.gmra.mrb[0].mxu0 %v1497
        %v1547 = vpop.f32.mrb[0].mxu0
        %v1548 = vadd.f32 %v1479, %v1547
        %v1549 = vpop.f32.mrb[0].mxu0
        %v1550 = vpop.f32.mrb[0].mxu0
        %v1551 = vadd.f32 %v1479, %v1550
        %v1552 = vpop.f32.mrb[0].mxu0
        %1553 = vmatprep.mubr.bf16.mxu0 0
        %1554 = vmatmul.mubr.bf16.gmra.mrb[0].mxu0 %v1500
        %v1555 = vpop.f32.mrb[0].mxu0
        %v1556 = vadd.f32 %v1479, %v1555
        %v1557 = vpop.f32.mrb[0].mxu0
        %v1558 = vpop.f32.mrb[0].mxu0
        %v1559 = vadd.f32 %v1479, %v1558
        %v1560 = vpop.f32.mrb[0].mxu0
        %1561 = vmatprep.mubr.bf16.mxu0 0
        %1562 = vmatmul.mubr.bf16.gmra.mrb[0].mxu0 %v1503
        %v1563 = vpop.f32.mrb[0].mxu0
        %v1564 = vadd.f32 %v1479, %v1563
        %v1565 = vpop.f32.mrb[0].mxu0
        %v1566 = vpop.f32.mrb[0].mxu0
        %v1567 = vadd.f32 %v1479, %v1566
        %v1568 = vpop.f32.mrb[0].mxu0
        %1569 = vdwg.mxu0
        %1570 = vxpose.xlu0.b32.start [1/16] %v1540, 128
        %1571 = vxpose.xlu0.b32.cont [2/16] %v1543, 128
        %1572 = vxpose.xlu0.b32.cont [3/16] %v1548, 128
        %1573 = vxpose.xlu0.b32.cont [4/16] %v1551, 128
        %1574 = vxpose.xlu0.b32.cont [5/16] 0.0, 128
        %1575 = vxpose.xlu0.b32.cont [6/16] 0.0, 128
        %1576 = vxpose.xlu0.b32.cont [7/16] 0.0, 128
        %1577 = vxpose.xlu0.b32.cont [8/16] 0.0, 128
        %1578 = vxpose.xlu0.b32.cont [9/16] 0.0, 128
        %1579 = vxpose.xlu0.b32.cont [10/16] 0.0, 128
        %1580 = vxpose.xlu0.b32.cont [11/16] 0.0, 128
        %1581 = vxpose.xlu0.b32.cont [12/16] 0.0, 128
        %1582 = vxpose.xlu0.b32.cont [13/16] 0.0, 128
        %1583 = vxpose.xlu0.b32.cont [14/16] 0.0, 128
        %1584 = vxpose.xlu0.b32.cont [15/16] 0.0, 128
        %1585 = vxpose.xlu0.b32.end [16/16] 0.0, 128
        %v1586 = vpop.trf.xlu0
        %v1587 = vpop.trf.xlu0
        %v1588 = vpop.trf.xlu0
        %v1589 = vpop.trf.xlu0
        %v1590 = vpop.trf.xlu0
        %v1591 = vpop.trf.xlu0
        %v1592 = vpop.trf.xlu0
        %v1593 = vpop.trf.xlu0
        %v1594 = vpop.trf.xlu0
        %v1595 = vpop.trf.xlu0
        %v1596 = vpop.trf.xlu0
        %v1597 = vpop.trf.xlu0
        %v1598 = vpop.trf.xlu0
        %v1599 = vpop.trf.xlu0
        %v1600 = vpop.trf.xlu0
        %v1601 = vpop.trf.xlu0
        %1602 = vxpose.xlu0.b32.start [1/16] %v1556, 128
        %1603 = vxpose.xlu0.b32.cont [2/16] %v1559, 128
        %1604 = vxpose.xlu0.b32.cont [3/16] %v1564, 128
        %1605 = vxpose.xlu0.b32.cont [4/16] %v1567, 128
        %1606 = vxpose.xlu0.b32.cont [5/16] 0.0, 128
        %1607 = vxpose.xlu0.b32.cont [6/16] 0.0, 128
        %1608 = vxpose.xlu0.b32.cont [7/16] 0.0, 128
        %1609 = vxpose.xlu0.b32.cont [8/16] 0.0, 128
        %1610 = vxpose.xlu0.b32.cont [9/16] 0.0, 128
        %1611 = vxpose.xlu0.b32.cont [10/16] 0.0, 128
        %1612 = vxpose.xlu0.b32.cont [11/16] 0.0, 128
        %1613 = vxpose.xlu0.b32.cont [12/16] 0.0, 128
        %1614 = vxpose.xlu0.b32.cont [13/16] 0.0, 128
        %1615 = vxpose.xlu0.b32.cont [14/16] 0.0, 128
        %1616 = vxpose.xlu0.b32.cont [15/16] 0.0, 128
        %1617 = vxpose.xlu0.b32.end [16/16] 0.0, 128
        %v1618 = vpop.trf.xlu0
        %v1619 = vpop.trf.xlu0
        %v1620 = vpop.trf.xlu0
        %v1621 = vpop.trf.xlu0
        %v1622 = vpop.trf.xlu0
        %v1623 = vpop.trf.xlu0
        %v1624 = vpop.trf.xlu0
        %v1625 = vpop.trf.xlu0
        %v1626 = vpop.trf.xlu0
        %v1627 = vpop.trf.xlu0
        %v1628 = vpop.trf.xlu0
        %v1629 = vpop.trf.xlu0
        %v1630 = vpop.trf.xlu0
        %v1631 = vpop.trf.xlu0
        %v1632 = vpop.trf.xlu0
        %v1633 = vpop.trf.xlu0
        %v1634 = vadd.f32 %v1298, %v1586
        %v1635 = vadd.f32 %v1299, %v1618
        %1636 = vst.msk [vmem:[#allocation2] sm:$0xff] %vm1181, %v1634
        %1637 = vst.msk [vmem:[#allocation2 + $0x8] sm:$0xff] %vm1181, %v1635
        %p1638 = scmp.eq.s32.totalorder %s33, 1
        // Predicated region
        $region101: #{tpu_custom_call.1} parent=75 // pred_check
          %p1639 = pneg %p1638
        $region102: #{tpu_custom_call.1} parent=75 // pred_check_branch
          %1641 = sbr.rel (%p1639) target = $region104
        $region103: #{tpu_custom_call.1} parent=75 // pred_region
          %v1642 = vpack.c.bf16 %v1635, %v1634
          %v1643 = vld [vmem:[%s12] sm:$0xf]
          %v1644 = vld [vmem:[%s12 + $0x4] sm:$0xf]
          %v1645 = vld [vmem:[%s12 + $0x8] sm:$0xf]
          %v1646 = vld [vmem:[%s12 + $0xc] sm:$0xf]
          %v1647 = vld [vmem:[%s13] sm:$0x1]
          %v1649 = vlaneseq
          %v1650 = vshrl.u32 %v1649, 7
          %v1651 = vsub.s32 0, %v1650
          %v1652 = vrot.slane %v1647, %v1651
          %v1658 = vunpack.c.l.b16 %v1643
          %v1659 = vunpack.c.l.b16 %v1644
          %v1660 = vunpack.c.l.b16 %v1645
          %v1661 = vunpack.c.l.b16 %v1646
          %v1662 = vpack.c.b16 %v1659, %v1658
          %v1663 = vpack.c.b16 %v1661, %v1660
          %v1667 = vsel %vm1181, %v1642, 0
          %1669 = vmatprep.subr.bf16.mxu0 0
          %1670 = vmatpush1.bf16.msra.mxu0 %v1662
          %1671 = vmatprep.subr.bf16.mxu0 0
          %1672 = vmatpush1.bf16.msra.mxu0 %v1663
          %1673 = vmatprep.subr.bf16.mxu0 0
          %1674 = vmatpush1.bf16.msra.mxu0 0
          %1675 = vmatprep.subr.bf16.mxu0 0
          %1676 = vmatpush1.bf16.msra.mxu0 0
          %1677 = vmatprep.subr.bf16.mxu0 0
          %1678 = vmatpush1.bf16.msra.mxu0 0
          %1679 = vmatprep.subr.bf16.mxu0 0
          %1680 = vmatpush1.bf16.msra.mxu0 0
          %1681 = vmatprep.subr.bf16.mxu0 0
          %1682 = vmatpush1.bf16.msra.mxu0 0
          %1683 = vmatprep.subr.bf16.mxu0 0
          %1684 = vmatpush1.bf16.msra.mxu0 0
          %1685 = vmatprep.subr.bf16.mxu0 0
          %1686 = vmatpush1.bf16.msra.mxu0 0
          %1687 = vmatprep.subr.bf16.mxu0 0
          %1688 = vmatpush1.bf16.msra.mxu0 0
          %1689 = vmatprep.subr.bf16.mxu0 0
          %1690 = vmatpush1.bf16.msra.mxu0 0
          %1691 = vmatprep.subr.bf16.mxu0 0
          %1692 = vmatpush1.bf16.msra.mxu0 0
          %1693 = vmatprep.subr.bf16.mxu0 0
          %1694 = vmatpush1.bf16.msra.mxu0 0
          %1695 = vmatprep.subr.bf16.mxu0 0
          %1696 = vmatpush1.bf16.msra.mxu0 0
          %1697 = vmatprep.subr.bf16.mxu0 0
          %1698 = vmatpush1.bf16.msra.mxu0 0
          %1699 = vmatprep.subr.bf16.mxu0 0
          %1700 = vmatpush1.bf16.msra.mxu0 0
          %1701 = vmatprep.mubr.bf16.mxu0 0
          %1702 = vmatmul.mubr.bf16.gmra.mrb[0].mxu0 %v1667
          %v1703 = vpop.f32.mrb[0].mxu0
          %v1704 = vadd.f32 %v1652, %v1703
          %v1705 = vpop.f32.mrb[0].mxu0
          %v1706 = vpop.f32.mrb[0].mxu0
          %v1707 = vadd.f32 %v1652, %v1706
          %v1708 = vpop.f32.mrb[0].mxu0
          %1709 = vdwg.mxu0
          %v1710 = vld [vmem:[#allocation4] sm:$0xff]
          %v1711 = vld [vmem:[#allocation4 + $0x8] sm:$0xff]
          %1713 = vset.pattern.permute.xlu0 0
          %1714 = vperm.xlu0 %1713, %v1710
          %v1715 = vpop.permute.xlu0 %1714
          %1718 = vset.pattern.permute.xlu0 0
          %1719 = vperm.xlu0 %1718, %v1711
          %v1720 = vpop.permute.xlu0 %1719
          %v1722 = vmul.f32 %v1704, %v1715
          %v1723 = vmul.f32 %v1707, %v1720
          %v1724 = vld [vmem:[#allocation3] sm:$0xff]
          %v1725 = vld [vmem:[#allocation3 + $0x8] sm:$0xff]
          %1727 = vset.pattern.permute.xlu0 0
          %1728 = vperm.xlu0 %1727, %v1724
          %v1729 = vpop.permute.xlu0 %1728
          %1732 = vset.pattern.permute.xlu0 0
          %1733 = vperm.xlu0 %1732, %v1725
          %v1734 = vpop.permute.xlu0 %1733
          %v1736 = vadd.f32 %v1722, %v1729
          %v1737 = vadd.f32 %v1723, %v1734
          %1738 = vst.msk [vmem:[%s675] sm:$0xff] %vm1376, %v1736
          %1739 = vst.msk [vmem:[%s675 + $0x8] sm:$0xff] %vm1376, %v1737
        $region104: #{tpu_custom_call.1} parent=75 // pred_fallthru
          _
        %s1740 = smul.u32 2, %s32
        %p1741 = scmp.lt.s32.totalorder %s1740, 1
        %s1742 = scalar_select %p1741, %s1740, 1
        %s1743 = smul.addr %s1742, 8
        %s1744 = scalar_lea.vmem %s14, %s1743
        // Predicated region
        $region105: #{tpu_custom_call.1} parent=75 // pred_check
          %p1745 = pneg %p397
        $region106: #{tpu_custom_call.1} parent=75 // pred_check_branch
          %1747 = sbr.rel (%p1745) target = $region108
        $region107: #{tpu_custom_call.1} parent=75 // pred_region
          %s1748 = smul.u32 2, %s32
        $region108: #{tpu_custom_call.1} parent=75 // pred_fallthru
          _
        // Predicated region
        $region109: #{tpu_custom_call.1} parent=75 // pred_check
          %p1749 = pneg %p397
        $region110: #{tpu_custom_call.1} parent=75 // pred_check_branch
          %1751 = sbr.rel (%p1749) target = $region112
        $region111: #{tpu_custom_call.1} parent=75 // pred_region
          %s1752 = smul.u32 2, %s32
          %p1753 = scmp.lt.s32.totalorder %s1752, 1
          %s1754 = scalar_select %p1753, %s1752, 1
          %s1755 = smul.addr %s1754, 8
          %s1756 = scalar_lea.vmem %s14, %s1755
        $region112: #{tpu_custom_call.1} parent=75 // pred_fallthru
          _
      $region76: #{tpu_custom_call.1} parent=5 // pred_fallthru
        _
      %p1757 = scmp.le.s32.totalorder 2, %s23
      // Predicated region
      $region113: #{tpu_custom_call.1} parent=5 // pred_check
        %p1758 = pneg %p1757
      $region114: #{tpu_custom_call.1} parent=5 // pred_check_branch
        %1760 = sbr.rel (%p1758) target = $region116
      $region115: #{tpu_custom_call.1} parent=5 // pred_region
        %s1761 = ssub.s32 %s23, 2
      $region116: #{tpu_custom_call.1} parent=5 // pred_fallthru
        _
    $region6: #{tpu_custom_call.1} parent=1 // loop_footer
      %s27 = sadd.s32 1, %s23
    $region7: #{tpu_custom_call.1} parent=1 // loop_footer_branch
      %22 = sbr.rel target = $region3
    $region8: #{tpu_custom_call.1} parent=1 // loop_exit
      _
    %1762 = vsyncpa [#allocation6], 1
    %s1763 = scalar_lea.sflag [#allocation6], 1
    %1764 = vsyncpa %s1763, 1
    %1765 = vsyncpa [#allocation8], 1
    %1766 = vsyncpa [#allocation11], 1

</llo_original>
